<compile_context>
chip_gen: v7x
topology: tpu7x:2x2x1
jax: 0.10.0
libtpu: 0.0.40
codegen_flags: <defaults>
</compile_context>

<pallas_src>
import functools

import jax
import jax.numpy as jnp
import numpy as np
from jax import lax
from jax.experimental import pallas as pl
from jax.experimental.pallas import tpu as pltpu


# ----------------------------------------------------------------------------
# Fused kernel: one grid step == one image.  Activation layout inside the
# kernel is (H, W*C) with lane index = w*C + c  (w-major, channel-minor).
# ----------------------------------------------------------------------------
def _fused_net_kernel(x_ref, tw1_ref, bt1_ref, rs1_ref, cs1_ref,
                      tw2_ref, bt2_ref, rs2_ref, cs2_ref,
                      wfc1_ref, bfc1_ref, wfc2_ref, bfc2_ref, wfc3_ref, bfc3_ref,
                      out_ref, fm_ref):
    f32 = jnp.float32

    def dot(a, b):
        return jnp.dot(a, b, preferred_element_type=f32)

    x = x_ref[...]                                           # (16, 16)  (Cin == 1)

    # ---- conv1 (1->8, k=3, s=1, VALID) + bias + ReLU  -> (14, 14*8) ----------
    y1 = (dot(x[0:14, :], tw1_ref[0]) +
          dot(x[1:15, :], tw1_ref[1]) +
          dot(x[2:16, :], tw1_ref[2]) + bt1_ref[...])
    y1 = jnp.maximum(y1, 0.0)

    # ---- maxpool1 2x2/2  (14,112) -> (7,56): exact 0/1 selection matmuls ------
    rm1 = jnp.maximum(dot(rs1_ref[0], y1), dot(rs1_ref[1], y1))    # (7, 112)
    p1 = jnp.maximum(dot(rm1, cs1_ref[0]), dot(rm1, cs1_ref[1]))   # (7, 56)

    # ---- conv2 (8->16, k=3, s=1, VALID) + bias + ReLU -> (5, 5*16) ------------
    y2 = (dot(p1[0:5, :], tw2_ref[0]) +
          dot(p1[1:6, :], tw2_ref[1]) +
          dot(p1[2:7, :], tw2_ref[2]) + bt2_ref[...])
    y2 = jnp.maximum(y2, 0.0)

    # ---- maxpool2 2x2/2  (5,80) -> (2,32) -------------------------------------
    rm2 = jnp.maximum(dot(rs2_ref[0], y2), dot(rs2_ref[1], y2))    # (2, 80)
    p2 = jnp.maximum(dot(rm2, cs2_ref[0]), dot(rm2, cs2_ref[1]))   # (2, 32)

    fm_ref[...] = p2.astype(fm_ref.dtype)                          # pre-flatten maps

    # ---- fc1 + ReLU (NCHW flatten folded into the two per-row weights) --------
    h = dot(p2[0:1, :], wfc1_ref[0]) + dot(p2[1:2, :], wfc1_ref[1]) + bfc1_ref[...]
    h = jnp.maximum(h, 0.0)                                        # (1, 32)
    # ---- fc2 + ReLU ------------------------------------------------------------
    h = jnp.maximum(dot(h, wfc2_ref[...]) + bfc2_ref[...], 0.0)    # (1, 16)
    # ---- fc3 -------------------------------------------------------------------
    o = dot(h, wfc3_ref[...]) + bfc3_ref[...]                      # (1, 1)
    out_ref[...] = o.astype(out_ref.dtype)


# ----------------------------------------------------------------------------
# Wrapper-side (tiny, parameter-only) weight re-layouts.
# ----------------------------------------------------------------------------
def _conv_tap_weights(w_conv, w_in, w_out):
    """Per-kh tap matrices T[kh] of shape (w_in*Ci, w_out*Co) such that
       y[oh, ow*Co+co] = sum_kh (x[oh+kh, :] @ T[kh])[ow*Co+co]  == VALID conv."""
    co, ci, k, _ = w_conv.shape
    wt = jnp.transpose(w_conv, (2, 3, 1, 0))                 # (kh, kw, Ci, Co)
    kw_idx = jnp.arange(w_in)[:, None] - jnp.arange(w_out)[None, :]   # (w_in, w_out)
    valid = (kw_idx >= 0) & (kw_idx < k)
    vals = wt[:, jnp.clip(kw_idx, 0, k - 1)]                 # (k, w_in, w_out, Ci, Co)
    vals = jnp.where(valid[None, :, :, None, None], vals, 0.0)
    vals = jnp.transpose(vals, (0, 1, 3, 2, 4))              # (k, w_in, Ci, w_out, Co)
    return vals.reshape(k, w_in * ci, w_out * co)


def _row_pool_selectors(h_in):
    """(2, h_out, h_in) 0/1 matrices selecting even / odd rows of each 2x2 window."""
    h_out = (h_in - 2) // 2 + 1
    s = np.zeros((2, h_out, h_in), np.float32)
    r = np.arange(h_out)
    s[0, r, 2 * r] = 1.0
    s[1, r, 2 * r + 1] = 1.0
    return jnp.asarray(s)


def _col_pool_selectors(w_in, c):
    """(2, w_in*c, w_out*c) 0/1 matrices selecting even / odd w-columns per channel."""
    w_out = (w_in - 2) // 2 + 1
    s = np.zeros((2, w_in * c, w_out * c), np.float32)
    ow = np.repeat(np.arange(w_out), c)
    cc = np.tile(np.arange(c), w_out)
    col = ow * c + cc
    s[0, 2 * ow * c + cc, col] = 1.0
    s[1, (2 * ow + 1) * c + cc, col] = 1.0
    return jnp.asarray(s)


# ----------------------------------------------------------------------------
# Full forward pass (mirrors Net.forward for the configuration above).
# ----------------------------------------------------------------------------
def net_forward(x, params):
    (w1, b1, w2, b2, fw1, fb1, fw2, fb2, fw3, fb3) = params
    f32 = jnp.float32

    B = x.shape[0]
    H, W = x.shape[2], x.shape[3]
    K = w1.shape[2]                       # 3
    C1, C2 = w1.shape[0], w2.shape[0]     # 8, 16
    H1, W1 = H - K + 1, W - K + 1                         # 14, 14
    Hp1, Wp1 = (H1 - 2) // 2 + 1, (W1 - 2) // 2 + 1       # 7, 7
    H2, W2 = Hp1 - K + 1, Wp1 - K + 1                     # 5, 5
    Hp2, Wp2 = (H2 - 2) // 2 + 1, (W2 - 2) // 2 + 1       # 2, 2
    NF1, NF2, NF3 = fw1.shape[0], fw2.shape[0], fw3.shape[0]   # 32, 16, 1

    x3 = x.reshape(B, H, W).astype(f32)                   # Cin == 1

    # conv weights expanded to per-kh tap matrices; bias tiled into the lane layout
    tw1 = _conv_tap_weights(w1.astype(f32), W, W1)        # (3, 16, 112)
    bt1 = jnp.tile(b1.astype(f32), W1).reshape(1, W1 * C1)
    tw2 = _conv_tap_weights(w2.astype(f32), Wp1, W2)      # (3, 56, 80)
    bt2 = jnp.tile(b2.astype(f32), W2).reshape(1, W2 * C2)

    # exact 0/1 pooling selectors (constants baked at trace time)
    rs1 = _row_pool_selectors(H1)                         # (2, 7, 14)
    cs1 = _col_pool_selectors(W1, C1)                     # (2, 112, 56)
    rs2 = _row_pool_selectors(H2)                         # (2, 2, 5)
    cs2 = _col_pool_selectors(W2, C2)                     # (2, 80, 32)

    # fc1 weight split by pooled row h, with the NCHW flatten (c*HW + h*W + w)
    # folded into the (w*C + c) activation layout.
    wfc1 = fw1.astype(f32).reshape(NF1, C2, Hp2, Wp2)     # [o, c, h, w]
    wfc1 = jnp.transpose(wfc1, (2, 3, 1, 0)).reshape(Hp2, Wp2 * C2, NF1)   # (2, 32, 32)
    bfc1 = fb1.astype(f32).reshape(1, NF1)
    wfc2 = fw2.astype(f32).T                              # (32, 16)
    bfc2 = fb2.astype(f32).reshape(1, NF2)
    wfc3 = fw3.astype(f32).T                              # (16, 1)
    bfc3 = fb3.astype(f32).reshape(1, NF3)

    def const_spec(a):
        nd = a.ndim
        return pl.BlockSpec(a.shape, lambda b, _n=nd: (0,) * _n)

    weights = (tw1, bt1, rs1, cs1, tw2, bt2, rs2, cs2,
               wfc1, bfc1, wfc2, bfc2, wfc3, bfc3)

    flops_per_img = 2 * (3 * H1 * W * W1 * C1 + 2 * Hp1 * H1 * W1 * C1
                         + 2 * Hp1 * W1 * C1 * Wp1 * C1 + 3 * H2 * Wp1 * C1 * W2 * C2
                         + 2 * Hp2 * H2 * W2 * C2 + 2 * Hp2 * W2 * C2 * Wp2 * C2
                         + Hp2 * Wp2 * C2 * NF1 + NF1 * NF2 + NF2 * NF3)
    bytes_accessed = 4 * (B * H * W + sum(int(np.prod(a.shape)) for a in weights)
                          + B * (1 + Hp2 * Wp2 * C2))

    out3, fm_raw = pl.pallas_call(
        _fused_net_kernel,
        grid=(B,),
        in_specs=[pl.BlockSpec((None, H, W), lambda b: (b, 0, 0))]
                 + [const_spec(a) for a in weights],
        out_specs=(pl.BlockSpec((None, 1, 1), lambda b: (b, 0, 0)),
                   pl.BlockSpec((None, Hp2, Wp2 * C2), lambda b: (b, 0, 0))),
        out_shape=(jax.ShapeDtypeStruct((B, 1, 1), f32),
                   jax.ShapeDtypeStruct((B, Hp2, Wp2 * C2), f32)),
        compiler_params=pltpu.CompilerParams(dimension_semantics=("parallel",)),
        cost_estimate=pl.CostEstimate(flops=flops_per_img * B, transcendentals=0,
                                      bytes_accessed=bytes_accessed),
    )(x3, *weights)

    out = out3.reshape(B, 1)
    # feature_maps_cnn: pre-flatten conv activations, NCHW like PyTorch.
    feature_maps_cnn = fm_raw.reshape(B, Hp2, Wp2, C2).transpose(0, 3, 1, 2)
    feature_maps_fc = out
    # TODO(synk): dropout (p=0.0) and the batch-regularization branches are
    # disabled in this configuration; the NaN/Inf weight guard is host-side
    # control flow and is not reproduced in-kernel.
    return out, feature_maps_cnn, feature_maps_fc


# ----------------------------------------------------------------------------
# Pure-JAX reference (lax conv / reduce_window) used only for verification.
# ----------------------------------------------------------------------------
def net_forward_ref(x, params):
    (w1, b1, w2, b2, fw1, fb1, fw2, fb2, fw3, fb3) = params
    B = x.shape[0]

    def conv(a, w, b):
        o = lax.conv_general_dilated(a, w, (1, 1), 'VALID',
                                     dimension_numbers=('NCHW', 'OIHW', 'NCHW'))
        return o + b[None, :, None, None]

    def pool(a):
        return lax.reduce_window(a, -jnp.inf, lax.max,
                                 (1, 1, 2, 2), (1, 1, 2, 2), 'VALID')

    y = jnp.maximum(conv(x, w1, b1), 0.0)
    y = pool(y)
    y = jnp.maximum(conv(y, w2, b2), 0.0)
    y = pool(y)
    fm = y
    flat = y.reshape(B, -1)
    h = jnp.maximum(flat @ fw1.T + fb1, 0.0)
    h = jnp.maximum(h @ fw2.T + fb2, 0.0)
    out = h @ fw3.T + fb3
    return out, fm, out


# ----------------------------------------------------------------------------
def make_params(key):
    ks = jax.random.split(key, 10)
    f32 = jnp.float32
    w1 = 0.1 * jax.random.normal(ks[0], (8, 1, 3, 3), f32)
    b1 = 0.1 * jax.random.normal(ks[1], (8,), f32)
    w2 = 0.1 * jax.random.normal(ks[2], (16, 8, 3, 3), f32)
    b2 = 0.1 * jax.random.normal(ks[3], (16,), f32)
    fw1 = 0.1 * jax.random.normal(ks[4], (32, 64), f32)   # fc1: 16*2*2 -> 32
    fb1 = 0.1 * jax.random.normal(ks[5], (32,), f32)
    fw2 = 0.1 * jax.random.normal(ks[6], (16, 32), f32)   # fc2: 32 -> 16
    fb2 = 0.1 * jax.random.normal(ks[7], (16,), f32)
    fw3 = 0.1 * jax.random.normal(ks[8], (1, 16), f32)    # fc3: 16 -> 1
    fb3 = 0.1 * jax.random.normal(ks[9], (1,), f32)
    return (w1, b1, w2, b2, fw1, fb1, fw2, fb2, fw3, fb3)


if __name__ == "__main__":
    key = jax.random.PRNGKey(0)
    k_x, k_p = jax.random.split(key)
    x = jax.random.normal(k_x, (2, 1, 16, 16), jnp.float32)   # NCHW, like PyTorch
    params = make_params(k_p)

    fwd = jax.jit(net_forward)
    out, fm_cnn, fm_fc = fwd(x, params)
    jax.block_until_ready(out)
    jax.block_until_ready(fm_cnn)

    # verify against pure-JAX reference
    ro, rfm, _ = net_forward_ref(x, params)
    np.testing.assert_allclose(np.asarray(out), np.asarray(ro), rtol=1e-4, atol=2e-5)
    np.testing.assert_allclose(np.asarray(fm_cnn), np.asarray(rfm), rtol=1e-4, atol=2e-5)
    assert out.shape == (2, 1) and fm_cnn.shape == (2, 16, 2, 2)
    assert fm_fc.shape == (2, 1)

    print("KERNEL_OK")
</pallas_src>

<mosaic_0001>
module attributes {stable_mosaic.version = 11 : i64} {
  func.func @_fused_net_kernel(%arg0: i32, %arg1: memref<1x16x16xf32, #tpu.memory_space<vmem>>, %arg2: memref<3x16x112xf32, #tpu.memory_space<vmem>>, %arg3: memref<1x112xf32, #tpu.memory_space<vmem>>, %arg4: memref<2x7x14xf32, #tpu.memory_space<vmem>>, %arg5: memref<2x112x56xf32, #tpu.memory_space<vmem>>, %arg6: memref<3x56x80xf32, #tpu.memory_space<vmem>>, %arg7: memref<1x80xf32, #tpu.memory_space<vmem>>, %arg8: memref<2x2x5xf32, #tpu.memory_space<vmem>>, %arg9: memref<2x80x32xf32, #tpu.memory_space<vmem>>, %arg10: memref<2x32x32xf32, #tpu.memory_space<vmem>>, %arg11: memref<1x32xf32, #tpu.memory_space<vmem>>, %arg12: memref<32x16xf32, #tpu.memory_space<vmem>>, %arg13: memref<1x16xf32, #tpu.memory_space<vmem>>, %arg14: memref<16x1xf32, #tpu.memory_space<vmem>>, %arg15: memref<1x1xf32, #tpu.memory_space<vmem>>, %arg16: memref<1x1x1xf32, #tpu.memory_space<vmem>>, %arg17: memref<1x2x32xf32, #tpu.memory_space<vmem>>) attributes {dimension_semantics = [#tpu.dimension_semantics<parallel>], iteration_bounds = array<i64: 2>, scalar_prefetch = 0 : i64, scratch_operands = 0 : i64, tpu.core_type = #tpu.core_type<tc>, window_params = [{transform_indices = @transform_0, window_bounds = array<i64: 1, 16, 16>}, {pipeline_mode = #tpu.pipeline_mode<synchronous>, transform_indices = @transform_1, window_bounds = array<i64: 3, 16, 112>}, {pipeline_mode = #tpu.pipeline_mode<synchronous>, transform_indices = @transform_2, window_bounds = array<i64: 1, 112>}, {pipeline_mode = #tpu.pipeline_mode<synchronous>, transform_indices = @transform_3, window_bounds = array<i64: 2, 7, 14>}, {pipeline_mode = #tpu.pipeline_mode<synchronous>, transform_indices = @transform_4, window_bounds = array<i64: 2, 112, 56>}, {pipeline_mode = #tpu.pipeline_mode<synchronous>, transform_indices = @transform_5, window_bounds = array<i64: 3, 56, 80>}, {pipeline_mode = #tpu.pipeline_mode<synchronous>, transform_indices = @transform_6, window_bounds = array<i64: 1, 80>}, {pipeline_mode = #tpu.pipeline_mode<synchronous>, transform_indices = @transform_7, window_bounds = array<i64: 2, 2, 5>}, {pipeline_mode = #tpu.pipeline_mode<synchronous>, transform_indices = @transform_8, window_bounds = array<i64: 2, 80, 32>}, {pipeline_mode = #tpu.pipeline_mode<synchronous>, transform_indices = @transform_9, window_bounds = array<i64: 2, 32, 32>}, {pipeline_mode = #tpu.pipeline_mode<synchronous>, transform_indices = @transform_10, window_bounds = array<i64: 1, 32>}, {pipeline_mode = #tpu.pipeline_mode<synchronous>, transform_indices = @transform_11, window_bounds = array<i64: 32, 16>}, {pipeline_mode = #tpu.pipeline_mode<synchronous>, transform_indices = @transform_12, window_bounds = array<i64: 1, 16>}, {pipeline_mode = #tpu.pipeline_mode<synchronous>, transform_indices = @transform_13, window_bounds = array<i64: 16, 1>}, {pipeline_mode = #tpu.pipeline_mode<synchronous>, transform_indices = @transform_14, window_bounds = array<i64: 1, 1>}, {transform_indices = @transform_15, window_bounds = array<i64: 1, 1, 1>}, {transform_indices = @transform_16, window_bounds = array<i64: 1, 2, 32>}]} {
    %c0 = arith.constant 0 : index
    %c0_0 = arith.constant 0 : index
    %c0_1 = arith.constant 0 : index
    %0 = vector.load %arg1[%c0, %c0_0, %c0_1] : memref<1x16x16xf32, #tpu.memory_space<vmem>>, vector<1x16x16xf32>
    %1 = vector.shape_cast %0 : vector<1x16x16xf32> to vector<16x16xf32>
    %2 = vector.extract_strided_slice %1 {offsets = [0, 0], sizes = [14, 16], strides = [1, 1]} : vector<16x16xf32> to vector<14x16xf32>
    %c0_2 = arith.constant 0 : index
    %c0_3 = arith.constant 0 : index
    %c0_4 = arith.constant 0 : index
    %3 = vector.load %arg2[%c0_2, %c0_3, %c0_4] : memref<3x16x112xf32, #tpu.memory_space<vmem>>, vector<1x16x112xf32>
    %4 = vector.shape_cast %3 : vector<1x16x112xf32> to vector<16x112xf32>
    %cst = arith.constant dense<0.000000e+00> : vector<14x112xf32>
    %5 = tpu.matmul %2, %4, %cst {dimension_numbers = #tpu.dot_dimension_numbers<[1], [0], [0], [1], [0, 0, 1, 1], [], []>} : vector<14x16xf32>, vector<16x112xf32>, vector<14x112xf32> -> vector<14x112xf32>
    %6 = vector.extract_strided_slice %1 {offsets = [1, 0], sizes = [14, 16], strides = [1, 1]} : vector<16x16xf32> to vector<14x16xf32>
    %c1 = arith.constant 1 : index
    %c0_5 = arith.constant 0 : index
    %c0_6 = arith.constant 0 : index
    %7 = vector.load %arg2[%c1, %c0_5, %c0_6] : memref<3x16x112xf32, #tpu.memory_space<vmem>>, vector<1x16x112xf32>
    %8 = vector.shape_cast %7 : vector<1x16x112xf32> to vector<16x112xf32>
    %cst_7 = arith.constant dense<0.000000e+00> : vector<14x112xf32>
    %9 = tpu.matmul %6, %8, %cst_7 {dimension_numbers = #tpu.dot_dimension_numbers<[1], [0], [0], [1], [0, 0, 1, 1], [], []>} : vector<14x16xf32>, vector<16x112xf32>, vector<14x112xf32> -> vector<14x112xf32>
    %10 = arith.addf %5, %9 : vector<14x112xf32>
    %11 = vector.extract_strided_slice %1 {offsets = [2, 0], sizes = [14, 16], strides = [1, 1]} : vector<16x16xf32> to vector<14x16xf32>
    %c2 = arith.constant 2 : index
    %c0_8 = arith.constant 0 : index
    %c0_9 = arith.constant 0 : index
    %12 = vector.load %arg2[%c2, %c0_8, %c0_9] : memref<3x16x112xf32, #tpu.memory_space<vmem>>, vector<1x16x112xf32>
    %13 = vector.shape_cast %12 : vector<1x16x112xf32> to vector<16x112xf32>
    %cst_10 = arith.constant dense<0.000000e+00> : vector<14x112xf32>
    %14 = tpu.matmul %11, %13, %cst_10 {dimension_numbers = #tpu.dot_dimension_numbers<[1], [0], [0], [1], [0, 0, 1, 1], [], []>} : vector<14x16xf32>, vector<16x112xf32>, vector<14x112xf32> -> vector<14x112xf32>
    %15 = arith.addf %10, %14 : vector<14x112xf32>
    %c0_11 = arith.constant 0 : index
    %c0_12 = arith.constant 0 : index
    %16 = vector.load %arg3[%c0_11, %c0_12] : memref<1x112xf32, #tpu.memory_space<vmem>>, vector<1x112xf32>
    %17 = vector.broadcast %16 : vector<1x112xf32> to vector<14x112xf32>
    %18 = arith.addf %15, %17 : vector<14x112xf32>
    %cst_13 = arith.constant 0.000000e+00 : f32
    %19 = vector.broadcast %cst_13 : f32 to vector<14x112xf32>
    %20 = arith.maximumf %18, %19 : vector<14x112xf32>
    %c0_14 = arith.constant 0 : index
    %c0_15 = arith.constant 0 : index
    %c0_16 = arith.constant 0 : index
    %21 = vector.load %arg4[%c0_14, %c0_15, %c0_16] : memref<2x7x14xf32, #tpu.memory_space<vmem>>, vector<1x7x14xf32>
    %22 = vector.shape_cast %21 : vector<1x7x14xf32> to vector<7x14xf32>
    %cst_17 = arith.constant dense<0.000000e+00> : vector<7x112xf32>
    %23 = tpu.matmul %22, %20, %cst_17 {dimension_numbers = #tpu.dot_dimension_numbers<[1], [0], [0], [1], [0, 0, 1, 1], [], []>} : vector<7x14xf32>, vector<14x112xf32>, vector<7x112xf32> -> vector<7x112xf32>
    %c1_18 = arith.constant 1 : index
    %c0_19 = arith.constant 0 : index
    %c0_20 = arith.constant 0 : index
    %24 = vector.load %arg4[%c1_18, %c0_19, %c0_20] : memref<2x7x14xf32, #tpu.memory_space<vmem>>, vector<1x7x14xf32>
    %25 = vector.shape_cast %24 : vector<1x7x14xf32> to vector<7x14xf32>
    %cst_21 = arith.constant dense<0.000000e+00> : vector<7x112xf32>
    %26 = tpu.matmul %25, %20, %cst_21 {dimension_numbers = #tpu.dot_dimension_numbers<[1], [0], [0], [1], [0, 0, 1, 1], [], []>} : vector<7x14xf32>, vector<14x112xf32>, vector<7x112xf32> -> vector<7x112xf32>
    %27 = arith.maximumf %23, %26 : vector<7x112xf32>
    %c0_22 = arith.constant 0 : index
    %c0_23 = arith.constant 0 : index
    %c0_24 = arith.constant 0 : index
    %28 = vector.load %arg5[%c0_22, %c0_23, %c0_24] : memref<2x112x56xf32, #tpu.memory_space<vmem>>, vector<1x112x56xf32>
    %29 = vector.shape_cast %28 : vector<1x112x56xf32> to vector<112x56xf32>
    %cst_25 = arith.constant dense<0.000000e+00> : vector<7x56xf32>
    %30 = tpu.matmul %27, %29, %cst_25 {dimension_numbers = #tpu.dot_dimension_numbers<[1], [0], [0], [1], [0, 0, 1, 1], [], []>} : vector<7x112xf32>, vector<112x56xf32>, vector<7x56xf32> -> vector<7x56xf32>
    %c1_26 = arith.constant 1 : index
    %c0_27 = arith.constant 0 : index
    %c0_28 = arith.constant 0 : index
    %31 = vector.load %arg5[%c1_26, %c0_27, %c0_28] : memref<2x112x56xf32, #tpu.memory_space<vmem>>, vector<1x112x56xf32>
    %32 = vector.shape_cast %31 : vector<1x112x56xf32> to vector<112x56xf32>
    %cst_29 = arith.constant dense<0.000000e+00> : vector<7x56xf32>
    %33 = tpu.matmul %27, %32, %cst_29 {dimension_numbers = #tpu.dot_dimension_numbers<[1], [0], [0], [1], [0, 0, 1, 1], [], []>} : vector<7x112xf32>, vector<112x56xf32>, vector<7x56xf32> -> vector<7x56xf32>
    %34 = arith.maximumf %30, %33 : vector<7x56xf32>
    %35 = vector.extract_strided_slice %34 {offsets = [0, 0], sizes = [5, 56], strides = [1, 1]} : vector<7x56xf32> to vector<5x56xf32>
    %c0_30 = arith.constant 0 : index
    %c0_31 = arith.constant 0 : index
    %c0_32 = arith.constant 0 : index
    %36 = vector.load %arg6[%c0_30, %c0_31, %c0_32] : memref<3x56x80xf32, #tpu.memory_space<vmem>>, vector<1x56x80xf32>
    %37 = vector.shape_cast %36 : vector<1x56x80xf32> to vector<56x80xf32>
    %cst_33 = arith.constant dense<0.000000e+00> : vector<5x80xf32>
    %38 = tpu.matmul %35, %37, %cst_33 {dimension_numbers = #tpu.dot_dimension_numbers<[1], [0], [0], [1], [0, 0, 1, 1], [], []>} : vector<5x56xf32>, vector<56x80xf32>, vector<5x80xf32> -> vector<5x80xf32>
    %39 = vector.extract_strided_slice %34 {offsets = [1, 0], sizes = [5, 56], strides = [1, 1]} : vector<7x56xf32> to vector<5x56xf32>
    %c1_34 = arith.constant 1 : index
    %c0_35 = arith.constant 0 : index
    %c0_36 = arith.constant 0 : index
    %40 = vector.load %arg6[%c1_34, %c0_35, %c0_36] : memref<3x56x80xf32, #tpu.memory_space<vmem>>, vector<1x56x80xf32>
    %41 = vector.shape_cast %40 : vector<1x56x80xf32> to vector<56x80xf32>
    %cst_37 = arith.constant dense<0.000000e+00> : vector<5x80xf32>
    %42 = tpu.matmul %39, %41, %cst_37 {dimension_numbers = #tpu.dot_dimension_numbers<[1], [0], [0], [1], [0, 0, 1, 1], [], []>} : vector<5x56xf32>, vector<56x80xf32>, vector<5x80xf32> -> vector<5x80xf32>
    %43 = arith.addf %38, %42 : vector<5x80xf32>
    %44 = vector.extract_strided_slice %34 {offsets = [2, 0], sizes = [5, 56], strides = [1, 1]} : vector<7x56xf32> to vector<5x56xf32>
    %c2_38 = arith.constant 2 : index
    %c0_39 = arith.constant 0 : index
    %c0_40 = arith.constant 0 : index
    %45 = vector.load %arg6[%c2_38, %c0_39, %c0_40] : memref<3x56x80xf32, #tpu.memory_space<vmem>>, vector<1x56x80xf32>
    %46 = vector.shape_cast %45 : vector<1x56x80xf32> to vector<56x80xf32>
    %cst_41 = arith.constant dense<0.000000e+00> : vector<5x80xf32>
    %47 = tpu.matmul %44, %46, %cst_41 {dimension_numbers = #tpu.dot_dimension_numbers<[1], [0], [0], [1], [0, 0, 1, 1], [], []>} : vector<5x56xf32>, vector<56x80xf32>, vector<5x80xf32> -> vector<5x80xf32>
    %48 = arith.addf %43, %47 : vector<5x80xf32>
    %c0_42 = arith.constant 0 : index
    %c0_43 = arith.constant 0 : index
    %49 = vector.load %arg7[%c0_42, %c0_43] : memref<1x80xf32, #tpu.memory_space<vmem>>, vector<1x80xf32>
    %50 = vector.broadcast %49 : vector<1x80xf32> to vector<5x80xf32>
    %51 = arith.addf %48, %50 : vector<5x80xf32>
    %cst_44 = arith.constant 0.000000e+00 : f32
    %52 = vector.broadcast %cst_44 : f32 to vector<5x80xf32>
    %53 = arith.maximumf %51, %52 : vector<5x80xf32>
    %c0_45 = arith.constant 0 : index
    %c0_46 = arith.constant 0 : index
    %c0_47 = arith.constant 0 : index
    %54 = vector.load %arg8[%c0_45, %c0_46, %c0_47] : memref<2x2x5xf32, #tpu.memory_space<vmem>>, vector<1x2x5xf32>
    %55 = vector.shape_cast %54 : vector<1x2x5xf32> to vector<2x5xf32>
    %cst_48 = arith.constant dense<0.000000e+00> : vector<2x80xf32>
    %56 = tpu.matmul %55, %53, %cst_48 {dimension_numbers = #tpu.dot_dimension_numbers<[1], [0], [0], [1], [0, 0, 1, 1], [], []>} : vector<2x5xf32>, vector<5x80xf32>, vector<2x80xf32> -> vector<2x80xf32>
    %c1_49 = arith.constant 1 : index
    %c0_50 = arith.constant 0 : index
    %c0_51 = arith.constant 0 : index
    %57 = vector.load %arg8[%c1_49, %c0_50, %c0_51] : memref<2x2x5xf32, #tpu.memory_space<vmem>>, vector<1x2x5xf32>
    %58 = vector.shape_cast %57 : vector<1x2x5xf32> to vector<2x5xf32>
    %cst_52 = arith.constant dense<0.000000e+00> : vector<2x80xf32>
    %59 = tpu.matmul %58, %53, %cst_52 {dimension_numbers = #tpu.dot_dimension_numbers<[1], [0], [0], [1], [0, 0, 1, 1], [], []>} : vector<2x5xf32>, vector<5x80xf32>, vector<2x80xf32> -> vector<2x80xf32>
    %60 = arith.maximumf %56, %59 : vector<2x80xf32>
    %c0_53 = arith.constant 0 : index
    %c0_54 = arith.constant 0 : index
    %c0_55 = arith.constant 0 : index
    %61 = vector.load %arg9[%c0_53, %c0_54, %c0_55] : memref<2x80x32xf32, #tpu.memory_space<vmem>>, vector<1x80x32xf32>
    %62 = vector.shape_cast %61 : vector<1x80x32xf32> to vector<80x32xf32>
    %cst_56 = arith.constant dense<0.000000e+00> : vector<2x32xf32>
    %63 = tpu.matmul %60, %62, %cst_56 {dimension_numbers = #tpu.dot_dimension_numbers<[1], [0], [0], [1], [0, 0, 1, 1], [], []>} : vector<2x80xf32>, vector<80x32xf32>, vector<2x32xf32> -> vector<2x32xf32>
    %c1_57 = arith.constant 1 : index
    %c0_58 = arith.constant 0 : index
    %c0_59 = arith.constant 0 : index
    %64 = vector.load %arg9[%c1_57, %c0_58, %c0_59] : memref<2x80x32xf32, #tpu.memory_space<vmem>>, vector<1x80x32xf32>
    %65 = vector.shape_cast %64 : vector<1x80x32xf32> to vector<80x32xf32>
    %cst_60 = arith.constant dense<0.000000e+00> : vector<2x32xf32>
    %66 = tpu.matmul %60, %65, %cst_60 {dimension_numbers = #tpu.dot_dimension_numbers<[1], [0], [0], [1], [0, 0, 1, 1], [], []>} : vector<2x80xf32>, vector<80x32xf32>, vector<2x32xf32> -> vector<2x32xf32>
    %67 = arith.maximumf %63, %66 : vector<2x32xf32>
    %c0_61 = arith.constant 0 : index
    %c0_62 = arith.constant 0 : index
    %c0_63 = arith.constant 0 : index
    %68 = vector.load %arg17[%c0_61, %c0_62, %c0_63] : memref<1x2x32xf32, #tpu.memory_space<vmem>>, vector<1x2x32xf32>
    %69 = vector.shape_cast %68 : vector<1x2x32xf32> to vector<2x32xf32>
    %70 = vector.shape_cast %67 : vector<2x32xf32> to vector<1x2x32xf32>
    tpu.vector_store %arg17[%c0_61, %c0_62, %c0_63], %70 {strides = array<i32>} : memref<1x2x32xf32, #tpu.memory_space<vmem>>, vector<1x2x32xf32>,
    %71 = vector.extract_strided_slice %67 {offsets = [0, 0], sizes = [1, 32], strides = [1, 1]} : vector<2x32xf32> to vector<1x32xf32>
    %c0_64 = arith.constant 0 : index
    %c0_65 = arith.constant 0 : index
    %c0_66 = arith.constant 0 : index
    %72 = vector.load %arg10[%c0_64, %c0_65, %c0_66] : memref<2x32x32xf32, #tpu.memory_space<vmem>>, vector<1x32x32xf32>
    %73 = vector.shape_cast %72 : vector<1x32x32xf32> to vector<32x32xf32>
    %cst_67 = arith.constant dense<0.000000e+00> : vector<1x32xf32>
    %74 = tpu.matmul %71, %73, %cst_67 {dimension_numbers = #tpu.dot_dimension_numbers<[1], [0], [0], [1], [0, 0, 1, 1], [], []>} : vector<1x32xf32>, vector<32x32xf32>, vector<1x32xf32> -> vector<1x32xf32>
    %75 = vector.extract_strided_slice %67 {offsets = [1, 0], sizes = [1, 32], strides = [1, 1]} : vector<2x32xf32> to vector<1x32xf32>
    %c1_68 = arith.constant 1 : index
    %c0_69 = arith.constant 0 : index
    %c0_70 = arith.constant 0 : index
    %76 = vector.load %arg10[%c1_68, %c0_69, %c0_70] : memref<2x32x32xf32, #tpu.memory_space<vmem>>, vector<1x32x32xf32>
    %77 = vector.shape_cast %76 : vector<1x32x32xf32> to vector<32x32xf32>
    %cst_71 = arith.constant dense<0.000000e+00> : vector<1x32xf32>
    %78 = tpu.matmul %75, %77, %cst_71 {dimension_numbers = #tpu.dot_dimension_numbers<[1], [0], [0], [1], [0, 0, 1, 1], [], []>} : vector<1x32xf32>, vector<32x32xf32>, vector<1x32xf32> -> vector<1x32xf32>
    %79 = arith.addf %74, %78 : vector<1x32xf32>
    %c0_72 = arith.constant 0 : index
    %c0_73 = arith.constant 0 : index
    %80 = vector.load %arg11[%c0_72, %c0_73] : memref<1x32xf32, #tpu.memory_space<vmem>>, vector<1x32xf32>
    %81 = arith.addf %79, %80 : vector<1x32xf32>
    %cst_74 = arith.constant 0.000000e+00 : f32
    %82 = vector.broadcast %cst_74 : f32 to vector<1x32xf32>
    %83 = arith.maximumf %81, %82 : vector<1x32xf32>
    %c0_75 = arith.constant 0 : index
    %c0_76 = arith.constant 0 : index
    %84 = vector.load %arg12[%c0_75, %c0_76] : memref<32x16xf32, #tpu.memory_space<vmem>>, vector<32x16xf32>
    %cst_77 = arith.constant dense<0.000000e+00> : vector<1x16xf32>
    %85 = tpu.matmul %83, %84, %cst_77 {dimension_numbers = #tpu.dot_dimension_numbers<[1], [0], [0], [1], [0, 0, 1, 1], [], []>} : vector<1x32xf32>, vector<32x16xf32>, vector<1x16xf32> -> vector<1x16xf32>
    %c0_78 = arith.constant 0 : index
    %c0_79 = arith.constant 0 : index
    %86 = vector.load %arg13[%c0_78, %c0_79] : memref<1x16xf32, #tpu.memory_space<vmem>>, vector<1x16xf32>
    %87 = arith.addf %85, %86 : vector<1x16xf32>
    %cst_80 = arith.constant 0.000000e+00 : f32
    %88 = vector.broadcast %cst_80 : f32 to vector<1x16xf32>
    %89 = arith.maximumf %87, %88 : vector<1x16xf32>
    %c0_81 = arith.constant 0 : index
    %c0_82 = arith.constant 0 : index
    %90 = vector.load %arg14[%c0_81, %c0_82] : memref<16x1xf32, #tpu.memory_space<vmem>>, vector<16x1xf32>
    %cst_83 = arith.constant dense<0.000000e+00> : vector<1x1xf32>
    %91 = tpu.matmul %89, %90, %cst_83 {dimension_numbers = #tpu.dot_dimension_numbers<[1], [0], [0], [1], [0, 0, 1, 1], [], []>} : vector<1x16xf32>, vector<16x1xf32>, vector<1x1xf32> -> vector<1x1xf32>
    %c0_84 = arith.constant 0 : index
    %c0_85 = arith.constant 0 : index
    %92 = vector.load %arg15[%c0_84, %c0_85] : memref<1x1xf32, #tpu.memory_space<vmem>>, vector<1x1xf32>
    %93 = arith.addf %91, %92 : vector<1x1xf32>
    %c0_86 = arith.constant 0 : index
    %c0_87 = arith.constant 0 : index
    %c0_88 = arith.constant 0 : index
    %94 = vector.load %arg16[%c0_86, %c0_87, %c0_88] : memref<1x1x1xf32, #tpu.memory_space<vmem>>, vector<1x1x1xf32>
    %95 = vector.shape_cast %94 : vector<1x1x1xf32> to vector<1x1xf32>
    %96 = vector.shape_cast %93 : vector<1x1xf32> to vector<1x1x1xf32>
    tpu.vector_store %arg16[%c0_86, %c0_87, %c0_88], %96 {strides = array<i32>} : memref<1x1x1xf32, #tpu.memory_space<vmem>>, vector<1x1x1xf32>,
    return
  }
  func.func @transform_0(%arg0: i32) -> (i32, i32, i32) {
    %c0_i32 = arith.constant 0 : i32
    %c0_i32_0 = arith.constant 0 : i32
    %c0_i32_1 = arith.constant 0 : i32
    return %arg0, %c0_i32, %c0_i32_0 : i32, i32, i32
  }
  func.func @transform_1(%arg0: i32) -> (i32, i32, i32) {
    %c0_i32 = arith.constant 0 : i32
    %c0_i32_0 = arith.constant 0 : i32
    %c0_i32_1 = arith.constant 0 : i32
    %c0_i32_2 = arith.constant 0 : i32
    return %c0_i32, %c0_i32_0, %c0_i32_1 : i32, i32, i32
  }
  func.func @transform_2(%arg0: i32) -> (i32, i32) {
    %c0_i32 = arith.constant 0 : i32
    %c0_i32_0 = arith.constant 0 : i32
    %c0_i32_1 = arith.constant 0 : i32
    return %c0_i32, %c0_i32_0 : i32, i32
  }
  func.func @transform_3(%arg0: i32) -> (i32, i32, i32) {
    %c0_i32 = arith.constant 0 : i32
    %c0_i32_0 = arith.constant 0 : i32
    %c0_i32_1 = arith.constant 0 : i32
    %c0_i32_2 = arith.constant 0 : i32
    return %c0_i32, %c0_i32_0, %c0_i32_1 : i32, i32, i32
  }
  func.func @transform_4(%arg0: i32) -> (i32, i32, i32) {
    %c0_i32 = arith.constant 0 : i32
    %c0_i32_0 = arith.constant 0 : i32
    %c0_i32_1 = arith.constant 0 : i32
    %c0_i32_2 = arith.constant 0 : i32
    return %c0_i32, %c0_i32_0, %c0_i32_1 : i32, i32, i32
  }
  func.func @transform_5(%arg0: i32) -> (i32, i32, i32) {
    %c0_i32 = arith.constant 0 : i32
    %c0_i32_0 = arith.constant 0 : i32
    %c0_i32_1 = arith.constant 0 : i32
    %c0_i32_2 = arith.constant 0 : i32
    return %c0_i32, %c0_i32_0, %c0_i32_1 : i32, i32, i32
  }
  func.func @transform_6(%arg0: i32) -> (i32, i32) {
    %c0_i32 = arith.constant 0 : i32
    %c0_i32_0 = arith.constant 0 : i32
    %c0_i32_1 = arith.constant 0 : i32
    return %c0_i32, %c0_i32_0 : i32, i32
  }
  func.func @transform_7(%arg0: i32) -> (i32, i32, i32) {
    %c0_i32 = arith.constant 0 : i32
    %c0_i32_0 = arith.constant 0 : i32
    %c0_i32_1 = arith.constant 0 : i32
    %c0_i32_2 = arith.constant 0 : i32
    return %c0_i32, %c0_i32_0, %c0_i32_1 : i32, i32, i32
  }
  func.func @transform_8(%arg0: i32) -> (i32, i32, i32) {
    %c0_i32 = arith.constant 0 : i32
    %c0_i32_0 = arith.constant 0 : i32
    %c0_i32_1 = arith.constant 0 : i32
    %c0_i32_2 = arith.constant 0 : i32
    return %c0_i32, %c0_i32_0, %c0_i32_1 : i32, i32, i32
  }
  func.func @transform_9(%arg0: i32) -> (i32, i32, i32) {
    %c0_i32 = arith.constant 0 : i32
    %c0_i32_0 = arith.constant 0 : i32
    %c0_i32_1 = arith.constant 0 : i32
    %c0_i32_2 = arith.constant 0 : i32
    return %c0_i32, %c0_i32_0, %c0_i32_1 : i32, i32, i32
  }
  func.func @transform_10(%arg0: i32) -> (i32, i32) {
    %c0_i32 = arith.constant 0 : i32
    %c0_i32_0 = arith.constant 0 : i32
    %c0_i32_1 = arith.constant 0 : i32
    return %c0_i32, %c0_i32_0 : i32, i32
  }
  func.func @transform_11(%arg0: i32) -> (i32, i32) {
    %c0_i32 = arith.constant 0 : i32
    %c0_i32_0 = arith.constant 0 : i32
    %c0_i32_1 = arith.constant 0 : i32
    return %c0_i32, %c0_i32_0 : i32, i32
  }
  func.func @transform_12(%arg0: i32) -> (i32, i32) {
    %c0_i32 = arith.constant 0 : i32
    %c0_i32_0 = arith.constant 0 : i32
    %c0_i32_1 = arith.constant 0 : i32
    return %c0_i32, %c0_i32_0 : i32, i32
  }
  func.func @transform_13(%arg0: i32) -> (i32, i32) {
    %c0_i32 = arith.constant 0 : i32
    %c0_i32_0 = arith.constant 0 : i32
    %c0_i32_1 = arith.constant 0 : i32
    return %c0_i32, %c0_i32_0 : i32, i32
  }
  func.func @transform_14(%arg0: i32) -> (i32, i32) {
    %c0_i32 = arith.constant 0 : i32
    %c0_i32_0 = arith.constant 0 : i32
    %c0_i32_1 = arith.constant 0 : i32
    return %c0_i32, %c0_i32_0 : i32, i32
  }
  func.func @transform_15(%arg0: i32) -> (i32, i32, i32) {
    %c0_i32 = arith.constant 0 : i32
    %c0_i32_0 = arith.constant 0 : i32
    %c0_i32_1 = arith.constant 0 : i32
    return %arg0, %c0_i32, %c0_i32_0 : i32, i32, i32
  }
  func.func @transform_16(%arg0: i32) -> (i32, i32, i32) {
    %c0_i32 = arith.constant 0 : i32
    %c0_i32_0 = arith.constant 0 : i32
    %c0_i32_1 = arith.constant 0 : i32
    return %arg0, %c0_i32, %c0_i32_0 : i32, i32, i32
  }
}

</mosaic_0001>

<llo_original>
// kernel: tile.13
$region0: #{tile.13}
  #allocation0 [shape = 's32[1]{0}', space=sflag, size = 0x4, scoped, tag = 'scoped memory for tile.13']
  %s0 = inlined_call_operand.vmem [shape: f32[8], index: 0, kind: input, shape index: {}]
  %s1 = inlined_call_operand.vmem [shape: f32[14,8], index: 1, kind: output, shape index: {}]
  // Predicated region
  $region2: #{tile.13} parent=0 // pred_check
    _
  $region3: #{tile.13} parent=0 // pred_check_branch
    %3 = sbr.rel (0) target = $region5
  $region4: #{tile.13} parent=0 // pred_region
    _
  $region5: #{tile.13} parent=0 // pred_fallthru
    _
  %v4 = vld [vmem:[%s0] ss:$0 sm:$0xff]
  %5 = vst [vmem:[%s1] sm:$0xff] %v4
  %s6 = scalar_lea.vmem %s1, 8
  %7 = vst [vmem:[%s6] sm:$0xff] %v4

// kernel: tile.14
$region0: #{tile.14}
  %s0 = inlined_call_operand.vmem [shape: f32[14,8], index: 0, kind: input, shape index: {}]
  %s1 = inlined_call_operand.vmem [shape: f32[1,112], index: 1, kind: output, shape index: {}]
  $region1: #{tile.14} parent=0
    #allocation0 [shape = 'u8[4096]{0}', space=vmem, size = 0x1000, scoped, tag = 'scoped mem for output reshape']
    %v2 = vld [vmem:[%s0] sm:$0x1]
    %vm3 = vcmask 64512
    %4 = vst.msk [vmem:[#allocation0] sm:$0x1] %vm3, %v2
    %s5 = scalar_lea.vmem %s0, 13
    %v6 = vld [vmem:[%s5] sm:$0x1]
    %7 = vrot.lane.b32.xlu0 %v6, 104
    %v8 = vpop.permute.xlu0 %7
    %vm9 = vcmask 917312
    %10 = vst.msk [vmem:[#allocation0] sm:$0x1] %vm9, %v8
    %s11 = scalar_lea.vmem %s0, 12
    %v12 = vld [vmem:[%s11] sm:$0x1]
    %13 = vrot.lane.b32.xlu0 %v12, 96
    %v14 = vpop.permute.xlu0 %13
    %vm15 = vcmask 851712
    %16 = vst.msk [vmem:[#allocation0] sm:$0x1] %vm15, %v14
    %s17 = scalar_lea.vmem %s0, 11
    %v18 = vld [vmem:[%s17] sm:$0x1]
    %19 = vrot.lane.b32.xlu0 %v18, 88
    %v20 = vpop.permute.xlu0 %19
    %vm21 = vcmask 786112
    %22 = vst.msk [vmem:[#allocation0] sm:$0x1] %vm21, %v20
    %s23 = scalar_lea.vmem %s0, 10
    %v24 = vld [vmem:[%s23] sm:$0x1]
    %25 = vrot.lane.b32.xlu0 %v24, 80
    %v26 = vpop.permute.xlu0 %25
    %vm27 = vcmask 720512
    %28 = vst.msk [vmem:[#allocation0] sm:$0x1] %vm27, %v26
    %s29 = scalar_lea.vmem %s0, 9
    %v30 = vld [vmem:[%s29] sm:$0x1]
    %31 = vrot.lane.b32.xlu0 %v30, 72
    %v32 = vpop.permute.xlu0 %31
    %vm33 = vcmask 654912
    %34 = vst.msk [vmem:[#allocation0] sm:$0x1] %vm33, %v32
    %s35 = scalar_lea.vmem %s0, 8
    %v36 = vld [vmem:[%s35] sm:$0x1]
    %37 = vrot.lane.b32.xlu0 %v36, 64
    %v38 = vpop.permute.xlu0 %37
    %vm39 = vcmask 589312
    %40 = vst.msk [vmem:[#allocation0] sm:$0x1] %vm39, %v38
    %s41 = scalar_lea.vmem %s0, 7
    %v42 = vld [vmem:[%s41] sm:$0x1]
    %43 = vrot.lane.b32.xlu0 %v42, 56
    %v44 = vpop.permute.xlu0 %43
    %vm45 = vcmask 523712
    %46 = vst.msk [vmem:[#allocation0] sm:$0x1] %vm45, %v44
    %s47 = scalar_lea.vmem %s0, 6
    %v48 = vld [vmem:[%s47] sm:$0x1]
    %49 = vrot.lane.b32.xlu0 %v48, 48
    %v50 = vpop.permute.xlu0 %49
    %vm51 = vcmask 458112
    %52 = vst.msk [vmem:[#allocation0] sm:$0x1] %vm51, %v50
    %s53 = scalar_lea.vmem %s0, 5
    %v54 = vld [vmem:[%s53] sm:$0x1]
    %55 = vrot.lane.b32.xlu0 %v54, 40
    %v56 = vpop.permute.xlu0 %55
    %vm57 = vcmask 392512
    %58 = vst.msk [vmem:[#allocation0] sm:$0x1] %vm57, %v56
    %s59 = scalar_lea.vmem %s0, 4
    %v60 = vld [vmem:[%s59] sm:$0x1]
    %61 = vrot.lane.b32.xlu0 %v60, 32
    %v62 = vpop.permute.xlu0 %61
    %vm63 = vcmask 326912
    %64 = vst.msk [vmem:[#allocation0] sm:$0x1] %vm63, %v62
    %s65 = scalar_lea.vmem %s0, 3
    %v66 = vld [vmem:[%s65] sm:$0x1]
    %67 = vrot.lane.b32.xlu0 %v66, 24
    %v68 = vpop.permute.xlu0 %67
    %vm69 = vcmask 261312
    %70 = vst.msk [vmem:[#allocation0] sm:$0x1] %vm69, %v68
    %s71 = scalar_lea.vmem %s0, 2
    %v72 = vld [vmem:[%s71] sm:$0x1]
    %73 = vrot.lane.b32.xlu0 %v72, 16
    %v74 = vpop.permute.xlu0 %73
    %vm75 = vcmask 195712
    %76 = vst.msk [vmem:[#allocation0] sm:$0x1] %vm75, %v74
    %s77 = scalar_lea.vmem %s0, 1
    %v78 = vld [vmem:[%s77] sm:$0x1]
    %79 = vrot.lane.b32.xlu0 %v78, 8
    %v80 = vpop.permute.xlu0 %79
    %vm81 = vcmask 130112
    %82 = vst.msk [vmem:[#allocation0] sm:$0x1] %vm81, %v80
    %s84 = sshllo.u32 0, 1
    %v86 = vld [vmem:[#allocation0] sm:%s84]
    %s87 = sshllo.u32 0, 1
    %88 = vst [vmem:[%s1] sm:%s87] %v86

// kernel: tile.18
$region0: #{tile.18}
  #allocation0 [shape = 's32[1]{0}', space=sflag, size = 0x4, scoped, tag = 'scoped memory for tile.18']
  %s0 = inlined_call_operand.vmem [shape: f32[16], index: 0, kind: input, shape index: {}]
  %s1 = inlined_call_operand.vmem [shape: f32[5,16], index: 1, kind: output, shape index: {}]
  // Predicated region
  $region2: #{tile.18} parent=0 // pred_check
    _
  $region3: #{tile.18} parent=0 // pred_check_branch
    %3 = sbr.rel (0) target = $region5
  $region4: #{tile.18} parent=0 // pred_region
    _
  $region5: #{tile.18} parent=0 // pred_fallthru
    _
  %v4 = vld [vmem:[%s0] ss:$0 sm:$0xff]
  %5 = vst [vmem:[%s1] sm:$0xff] %v4

// kernel: tile.19
$region0: #{tile.19}
  %s0 = inlined_call_operand.vmem [shape: f32[5,16], index: 0, kind: input, shape index: {}]
  %s1 = inlined_call_operand.vmem [shape: f32[1,80], index: 1, kind: output, shape index: {}]
  $region1: #{tile.19} parent=0
    #allocation0 [shape = 'u8[4096]{0}', space=vmem, size = 0x1000, scoped, tag = 'scoped mem for output reshape']
    %v2 = vld [vmem:[%s0] sm:$0x1]
    %vm3 = vcmask 130048
    %4 = vst.msk [vmem:[#allocation0] sm:$0x1] %vm3, %v2
    %s5 = scalar_lea.vmem %s0, 4
    %v6 = vld [vmem:[%s5] sm:$0x1]
    %7 = vrot.lane.b32.xlu0 %v6, 64
    %v8 = vpop.permute.xlu0 %7
    %vm9 = vcmask 654848
    %10 = vst.msk [vmem:[#allocation0] sm:$0x1] %vm9, %v8
    %s11 = scalar_lea.vmem %s0, 3
    %v12 = vld [vmem:[%s11] sm:$0x1]
    %13 = vrot.lane.b32.xlu0 %v12, 48
    %v14 = vpop.permute.xlu0 %13
    %vm15 = vcmask 523648
    %16 = vst.msk [vmem:[#allocation0] sm:$0x1] %vm15, %v14
    %s17 = scalar_lea.vmem %s0, 2
    %v18 = vld [vmem:[%s17] sm:$0x1]
    %19 = vrot.lane.b32.xlu0 %v18, 32
    %v20 = vpop.permute.xlu0 %19
    %vm21 = vcmask 392448
    %22 = vst.msk [vmem:[#allocation0] sm:$0x1] %vm21, %v20
    %s23 = scalar_lea.vmem %s0, 1
    %v24 = vld [vmem:[%s23] sm:$0x1]
    %25 = vrot.lane.b32.xlu0 %v24, 16
    %v26 = vpop.permute.xlu0 %25
    %vm27 = vcmask 261248
    %28 = vst.msk [vmem:[#allocation0] sm:$0x1] %vm27, %v26
    %s30 = sshllo.u32 0, 1
    %v32 = vld [vmem:[#allocation0] sm:%s30]
    %s33 = sshllo.u32 0, 1
    %34 = vst [vmem:[%s1] sm:%s33] %v32

// kernel: net_forward.1
$region0: #{net_forward.1}
  #allocation0 [shape = 'u32[]', space=smem, size = 0x4, offset = 0x4, fixed_abs, tag = 'smem constant byte address 0x4 - core index']
  #allocation1 [shape = 'u32[144,128]{1,0:T(1,128)}', space=vmem, size = 0x12000, scoped, tag = 'internal scratch']
  #allocation2 [shape = 'f32[1,1]{1,0:T(1,128)S(1)}', space=vmem, size = 0x200, scoped, tag = 'scoped memory for net_forward.1']
  %s0 = inlined_call_operand.vmem [shape: f32[2,16,16], index: 0, kind: input, shape index: {}]
  %s1 = inlined_call_operand.vmem [shape: f32[3,16,112], index: 1, kind: input, shape index: {}]
  %s2 = inlined_call_operand.vmem [shape: f32[1,112], index: 2, kind: input, shape index: {}]
  %s3 = inlined_call_operand.vmem [shape: f32[2,7,14], index: 3, kind: input, shape index: {}]
  %s4 = inlined_call_operand.vmem [shape: f32[2,112,56], index: 4, kind: input, shape index: {}]
  %s5 = inlined_call_operand.vmem [shape: f32[3,56,80], index: 5, kind: input, shape index: {}]
  %s6 = inlined_call_operand.vmem [shape: f32[1,80], index: 6, kind: input, shape index: {}]
  %s7 = inlined_call_operand.vmem [shape: f32[2,2,5], index: 7, kind: input, shape index: {}]
  %s8 = inlined_call_operand.vmem [shape: f32[2,80,32], index: 8, kind: input, shape index: {}]
  %s9 = inlined_call_operand.vmem [shape: f32[2,32,32], index: 9, kind: input, shape index: {}]
  %s10 = inlined_call_operand.vmem [shape: f32[1,32], index: 10, kind: input, shape index: {}]
  %s11 = inlined_call_operand.vmem [shape: f32[32,16], index: 11, kind: input, shape index: {}]
  %s12 = inlined_call_operand.vmem [shape: f32[1,16], index: 12, kind: input, shape index: {}]
  %s13 = inlined_call_operand.vmem [shape: f32[16,1], index: 13, kind: input, shape index: {}]
  %s14 = inlined_call_operand.<no memory space> [shape: f32[1,1], index: 14, kind: input, shape index: {}]
  %s15 = inlined_call_operand.vmem [shape: f32[2,1,1], index: 15, kind: output, shape index: {0}]
  %s16 = inlined_call_operand.vmem [shape: f32[2,2,32], index: 16, kind: output, shape index: {1}]
  %17 = xla_tuple %s15, %s16
  %s18 = sld [smem:[#allocation0]]
  $region101: #{net_forward.1} parent=0
    _
  %s20 = ssub.s32 1, %s18
  %s21 = scalar_select 0, %s20, %s18
  %v22 = vstv %s14
  %23 = vst [vmem:[#allocation2] sm:$0x1] %v22
  loop: start=0, step=1, limit=4
  $region2: #{net_forward.1} parent=0 // loop_pre_header
    _
  $region3: #{net_forward.1} parent=0 // loop_header
    %s25 = sphi 0, %s29
    %p26 = scmp.ge.s32.totalorder %s25, 4
    %s35 = sphi 0, %s37
    %s38 = sphi 0, %s35
    %s39 = sphi 0, %s38
    %s55 = sphi 0, %s39
    %s59 = sphi 0, %s59
    %s61 = sphi 0, %s59
    %s62 = sphi 0, %s61
    %s76 = sphi 0, %s62
    %s80 = sphi 0, %s80
    %s82 = sphi 0, %s80
    %s83 = sphi 0, %s82
    %s97 = sphi 0, %s83
    %s101 = sphi 0, %s101
    %s103 = sphi 0, %s101
    %s104 = sphi 0, %s103
    %s118 = sphi 0, %s104
    %s122 = sphi 0, %s122
    %s124 = sphi 0, %s122
    %s125 = sphi 0, %s124
    %s139 = sphi 0, %s125
    %s143 = sphi 0, %s143
    %s145 = sphi 0, %s143
    %s146 = sphi 0, %s145
    %s160 = sphi 0, %s146
    %s164 = sphi 0, %s164
    %s166 = sphi 0, %s164
    %s167 = sphi 0, %s166
    %s181 = sphi 0, %s167
    %s185 = sphi 0, %s185
    %s187 = sphi 0, %s185
    %s188 = sphi 0, %s187
    %s202 = sphi 0, %s188
    %s206 = sphi 0, %s206
    %s208 = sphi 0, %s206
    %s209 = sphi 0, %s208
    %s223 = sphi 0, %s209
    %s227 = sphi 0, %s227
    %s229 = sphi 0, %s227
    %s230 = sphi 0, %s229
    %s244 = sphi 0, %s230
    %s248 = sphi 0, %s248
    %s250 = sphi 0, %s248
    %s251 = sphi 0, %s250
    %s265 = sphi 0, %s251
    %s269 = sphi 0, %s269
    %s271 = sphi 0, %s269
    %s272 = sphi 0, %s271
    %s286 = sphi 0, %s272
    %s290 = sphi 0, %s290
    %s292 = sphi 0, %s290
    %s293 = sphi 0, %s292
    %s307 = sphi 0, %s293
    %s311 = sphi 0, %s311
    %s313 = sphi 0, %s311
    %s314 = sphi 0, %s313
    %s328 = sphi 0, %s314
    %s332 = sphi 0, %s332
    %s334 = sphi 0, %s332
    %s335 = sphi 0, %s334
    %s349 = sphi 0, %s335
    %s355 = sphi 0, %s357
    %s358 = sphi 0, %s355
    %s359 = sphi 0, %s358
    %s375 = sphi 0, %s359
    %s381 = sphi 0, %s383
    %s384 = sphi 0, %s381
    %s385 = sphi 0, %s384
    %s401 = sphi 0, %s385
  $region4: #{net_forward.1} parent=0 // loop_header_branch
    %28 = sbr.rel (%p26) target = $region8
  $region5: #{net_forward.1} parent=0 // loop_body
    %s30 = ssub.s32 %s25, 1
    %s31 = ssub.s32 %s25, 2
    %s32 = sadd.s32 %s25, 1
    %s33 = ssub.s32 %s25, %s32
    %p34 = scmp.eq.s32.totalorder %s33, 0
    %s36 = sadd.s32 %s35, 1
    %s37 = scalar_select %p34, %s35, %s36
    %p40 = pneg %p34
    %p41 = scmp.eq.s32.totalorder %s25, 1
    %p42 = por %p40, %p41
    %p43 = scmp.ne.s32.totalorder %s35, %s38
    %p44 = scmp.eq.s32.totalorder %s25, 0
    %p45 = por %p43, %p44
    %p46 = scmp.ne.s32.totalorder %s35, %s38
    %p47 = scmp.eq.s32.totalorder %s30, 1
    %p48 = por %p46, %p47
    %p49 = scmp.ne.s32.totalorder %s38, %s39
    %p50 = scmp.eq.s32.totalorder %s30, 0
    %p51 = por %p49, %p50
    %p52 = scmp.ne.s32.totalorder %s38, %s39
    %p53 = scmp.eq.s32.totalorder %s31, 1
    %p54 = por %p52, %p53
    %p56 = scmp.ne.s32.totalorder %s39, %s55
    %p57 = scmp.eq.s32.totalorder %s31, 0
    %p58 = por %p56, %p57
    %s60 = sadd.s32 %s59, 1
    %p63 = scmp.eq.s32.totalorder %s25, 1
    %p64 = scmp.ne.s32.totalorder %s59, %s61
    %p65 = scmp.eq.s32.totalorder %s25, 0
    %p66 = por %p64, %p65
    %p67 = scmp.ne.s32.totalorder %s59, %s61
    %p68 = scmp.eq.s32.totalorder %s30, 1
    %p69 = por %p67, %p68
    %p70 = scmp.ne.s32.totalorder %s61, %s62
    %p71 = scmp.eq.s32.totalorder %s30, 0
    %p72 = por %p70, %p71
    %p73 = scmp.ne.s32.totalorder %s61, %s62
    %p74 = scmp.eq.s32.totalorder %s31, 1
    %p75 = por %p73, %p74
    %p77 = scmp.ne.s32.totalorder %s62, %s76
    %p78 = scmp.eq.s32.totalorder %s31, 0
    %p79 = por %p77, %p78
    %s81 = sadd.s32 %s80, 1
    %p84 = scmp.eq.s32.totalorder %s25, 1
    %p85 = scmp.ne.s32.totalorder %s80, %s82
    %p86 = scmp.eq.s32.totalorder %s25, 0
    %p87 = por %p85, %p86
    %p88 = scmp.ne.s32.totalorder %s80, %s82
    %p89 = scmp.eq.s32.totalorder %s30, 1
    %p90 = por %p88, %p89
    %p91 = scmp.ne.s32.totalorder %s82, %s83
    %p92 = scmp.eq.s32.totalorder %s30, 0
    %p93 = por %p91, %p92
    %p94 = scmp.ne.s32.totalorder %s82, %s83
    %p95 = scmp.eq.s32.totalorder %s31, 1
    %p96 = por %p94, %p95
    %p98 = scmp.ne.s32.totalorder %s83, %s97
    %p99 = scmp.eq.s32.totalorder %s31, 0
    %p100 = por %p98, %p99
    %s102 = sadd.s32 %s101, 1
    %p105 = scmp.eq.s32.totalorder %s25, 1
    %p106 = scmp.ne.s32.totalorder %s101, %s103
    %p107 = scmp.eq.s32.totalorder %s25, 0
    %p108 = por %p106, %p107
    %p109 = scmp.ne.s32.totalorder %s101, %s103
    %p110 = scmp.eq.s32.totalorder %s30, 1
    %p111 = por %p109, %p110
    %p112 = scmp.ne.s32.totalorder %s103, %s104
    %p113 = scmp.eq.s32.totalorder %s30, 0
    %p114 = por %p112, %p113
    %p115 = scmp.ne.s32.totalorder %s103, %s104
    %p116 = scmp.eq.s32.totalorder %s31, 1
    %p117 = por %p115, %p116
    %p119 = scmp.ne.s32.totalorder %s104, %s118
    %p120 = scmp.eq.s32.totalorder %s31, 0
    %p121 = por %p119, %p120
    %s123 = sadd.s32 %s122, 1
    %p126 = scmp.eq.s32.totalorder %s25, 1
    %p127 = scmp.ne.s32.totalorder %s122, %s124
    %p128 = scmp.eq.s32.totalorder %s25, 0
    %p129 = por %p127, %p128
    %p130 = scmp.ne.s32.totalorder %s122, %s124
    %p131 = scmp.eq.s32.totalorder %s30, 1
    %p132 = por %p130, %p131
    %p133 = scmp.ne.s32.totalorder %s124, %s125
    %p134 = scmp.eq.s32.totalorder %s30, 0
    %p135 = por %p133, %p134
    %p136 = scmp.ne.s32.totalorder %s124, %s125
    %p137 = scmp.eq.s32.totalorder %s31, 1
    %p138 = por %p136, %p137
    %p140 = scmp.ne.s32.totalorder %s125, %s139
    %p141 = scmp.eq.s32.totalorder %s31, 0
    %p142 = por %p140, %p141
    %s144 = sadd.s32 %s143, 1
    %p147 = scmp.eq.s32.totalorder %s25, 1
    %p148 = scmp.ne.s32.totalorder %s143, %s145
    %p149 = scmp.eq.s32.totalorder %s25, 0
    %p150 = por %p148, %p149
    %p151 = scmp.ne.s32.totalorder %s143, %s145
    %p152 = scmp.eq.s32.totalorder %s30, 1
    %p153 = por %p151, %p152
    %p154 = scmp.ne.s32.totalorder %s145, %s146
    %p155 = scmp.eq.s32.totalorder %s30, 0
    %p156 = por %p154, %p155
    %p157 = scmp.ne.s32.totalorder %s145, %s146
    %p158 = scmp.eq.s32.totalorder %s31, 1
    %p159 = por %p157, %p158
    %p161 = scmp.ne.s32.totalorder %s146, %s160
    %p162 = scmp.eq.s32.totalorder %s31, 0
    %p163 = por %p161, %p162
    %s165 = sadd.s32 %s164, 1
    %p168 = scmp.eq.s32.totalorder %s25, 1
    %p169 = scmp.ne.s32.totalorder %s164, %s166
    %p170 = scmp.eq.s32.totalorder %s25, 0
    %p171 = por %p169, %p170
    %p172 = scmp.ne.s32.totalorder %s164, %s166
    %p173 = scmp.eq.s32.totalorder %s30, 1
    %p174 = por %p172, %p173
    %p175 = scmp.ne.s32.totalorder %s166, %s167
    %p176 = scmp.eq.s32.totalorder %s30, 0
    %p177 = por %p175, %p176
    %p178 = scmp.ne.s32.totalorder %s166, %s167
    %p179 = scmp.eq.s32.totalorder %s31, 1
    %p180 = por %p178, %p179
    %p182 = scmp.ne.s32.totalorder %s167, %s181
    %p183 = scmp.eq.s32.totalorder %s31, 0
    %p184 = por %p182, %p183
    %s186 = sadd.s32 %s185, 1
    %p189 = scmp.eq.s32.totalorder %s25, 1
    %p190 = scmp.ne.s32.totalorder %s185, %s187
    %p191 = scmp.eq.s32.totalorder %s25, 0
    %p192 = por %p190, %p191
    %p193 = scmp.ne.s32.totalorder %s185, %s187
    %p194 = scmp.eq.s32.totalorder %s30, 1
    %p195 = por %p193, %p194
    %p196 = scmp.ne.s32.totalorder %s187, %s188
    %p197 = scmp.eq.s32.totalorder %s30, 0
    %p198 = por %p196, %p197
    %p199 = scmp.ne.s32.totalorder %s187, %s188
    %p200 = scmp.eq.s32.totalorder %s31, 1
    %p201 = por %p199, %p200
    %p203 = scmp.ne.s32.totalorder %s188, %s202
    %p204 = scmp.eq.s32.totalorder %s31, 0
    %p205 = por %p203, %p204
    %s207 = sadd.s32 %s206, 1
    %p210 = scmp.eq.s32.totalorder %s25, 1
    %p211 = scmp.ne.s32.totalorder %s206, %s208
    %p212 = scmp.eq.s32.totalorder %s25, 0
    %p213 = por %p211, %p212
    %p214 = scmp.ne.s32.totalorder %s206, %s208
    %p215 = scmp.eq.s32.totalorder %s30, 1
    %p216 = por %p214, %p215
    %p217 = scmp.ne.s32.totalorder %s208, %s209
    %p218 = scmp.eq.s32.totalorder %s30, 0
    %p219 = por %p217, %p218
    %p220 = scmp.ne.s32.totalorder %s208, %s209
    %p221 = scmp.eq.s32.totalorder %s31, 1
    %p222 = por %p220, %p221
    %p224 = scmp.ne.s32.totalorder %s209, %s223
    %p225 = scmp.eq.s32.totalorder %s31, 0
    %p226 = por %p224, %p225
    %s228 = sadd.s32 %s227, 1
    %p231 = scmp.eq.s32.totalorder %s25, 1
    %p232 = scmp.ne.s32.totalorder %s227, %s229
    %p233 = scmp.eq.s32.totalorder %s25, 0
    %p234 = por %p232, %p233
    %p235 = scmp.ne.s32.totalorder %s227, %s229
    %p236 = scmp.eq.s32.totalorder %s30, 1
    %p237 = por %p235, %p236
    %p238 = scmp.ne.s32.totalorder %s229, %s230
    %p239 = scmp.eq.s32.totalorder %s30, 0
    %p240 = por %p238, %p239
    %p241 = scmp.ne.s32.totalorder %s229, %s230
    %p242 = scmp.eq.s32.totalorder %s31, 1
    %p243 = por %p241, %p242
    %p245 = scmp.ne.s32.totalorder %s230, %s244
    %p246 = scmp.eq.s32.totalorder %s31, 0
    %p247 = por %p245, %p246
    %s249 = sadd.s32 %s248, 1
    %p252 = scmp.eq.s32.totalorder %s25, 1
    %p253 = scmp.ne.s32.totalorder %s248, %s250
    %p254 = scmp.eq.s32.totalorder %s25, 0
    %p255 = por %p253, %p254
    %p256 = scmp.ne.s32.totalorder %s248, %s250
    %p257 = scmp.eq.s32.totalorder %s30, 1
    %p258 = por %p256, %p257
    %p259 = scmp.ne.s32.totalorder %s250, %s251
    %p260 = scmp.eq.s32.totalorder %s30, 0
    %p261 = por %p259, %p260
    %p262 = scmp.ne.s32.totalorder %s250, %s251
    %p263 = scmp.eq.s32.totalorder %s31, 1
    %p264 = por %p262, %p263
    %p266 = scmp.ne.s32.totalorder %s251, %s265
    %p267 = scmp.eq.s32.totalorder %s31, 0
    %p268 = por %p266, %p267
    %s270 = sadd.s32 %s269, 1
    %p273 = scmp.eq.s32.totalorder %s25, 1
    %p274 = scmp.ne.s32.totalorder %s269, %s271
    %p275 = scmp.eq.s32.totalorder %s25, 0
    %p276 = por %p274, %p275
    %p277 = scmp.ne.s32.totalorder %s269, %s271
    %p278 = scmp.eq.s32.totalorder %s30, 1
    %p279 = por %p277, %p278
    %p280 = scmp.ne.s32.totalorder %s271, %s272
    %p281 = scmp.eq.s32.totalorder %s30, 0
    %p282 = por %p280, %p281
    %p283 = scmp.ne.s32.totalorder %s271, %s272
    %p284 = scmp.eq.s32.totalorder %s31, 1
    %p285 = por %p283, %p284
    %p287 = scmp.ne.s32.totalorder %s272, %s286
    %p288 = scmp.eq.s32.totalorder %s31, 0
    %p289 = por %p287, %p288
    %s291 = sadd.s32 %s290, 1
    %p294 = scmp.eq.s32.totalorder %s25, 1
    %p295 = scmp.ne.s32.totalorder %s290, %s292
    %p296 = scmp.eq.s32.totalorder %s25, 0
    %p297 = por %p295, %p296
    %p298 = scmp.ne.s32.totalorder %s290, %s292
    %p299 = scmp.eq.s32.totalorder %s30, 1
    %p300 = por %p298, %p299
    %p301 = scmp.ne.s32.totalorder %s292, %s293
    %p302 = scmp.eq.s32.totalorder %s30, 0
    %p303 = por %p301, %p302
    %p304 = scmp.ne.s32.totalorder %s292, %s293
    %p305 = scmp.eq.s32.totalorder %s31, 1
    %p306 = por %p304, %p305
    %p308 = scmp.ne.s32.totalorder %s293, %s307
    %p309 = scmp.eq.s32.totalorder %s31, 0
    %p310 = por %p308, %p309
    %s312 = sadd.s32 %s311, 1
    %p315 = scmp.eq.s32.totalorder %s25, 1
    %p316 = scmp.ne.s32.totalorder %s311, %s313
    %p317 = scmp.eq.s32.totalorder %s25, 0
    %p318 = por %p316, %p317
    %p319 = scmp.ne.s32.totalorder %s311, %s313
    %p320 = scmp.eq.s32.totalorder %s30, 1
    %p321 = por %p319, %p320
    %p322 = scmp.ne.s32.totalorder %s313, %s314
    %p323 = scmp.eq.s32.totalorder %s30, 0
    %p324 = por %p322, %p323
    %p325 = scmp.ne.s32.totalorder %s313, %s314
    %p326 = scmp.eq.s32.totalorder %s31, 1
    %p327 = por %p325, %p326
    %p329 = scmp.ne.s32.totalorder %s314, %s328
    %p330 = scmp.eq.s32.totalorder %s31, 0
    %p331 = por %p329, %p330
    %s333 = sadd.s32 %s332, 1
    %p336 = scmp.eq.s32.totalorder %s25, 1
    %p337 = scmp.ne.s32.totalorder %s332, %s334
    %p338 = scmp.eq.s32.totalorder %s25, 0
    %p339 = por %p337, %p338
    %p340 = scmp.ne.s32.totalorder %s332, %s334
    %p341 = scmp.eq.s32.totalorder %s30, 1
    %p342 = por %p340, %p341
    %p343 = scmp.ne.s32.totalorder %s334, %s335
    %p344 = scmp.eq.s32.totalorder %s30, 0
    %p345 = por %p343, %p344
    %p346 = scmp.ne.s32.totalorder %s334, %s335
    %p347 = scmp.eq.s32.totalorder %s31, 1
    %p348 = por %p346, %p347
    %p350 = scmp.ne.s32.totalorder %s335, %s349
    %p351 = scmp.eq.s32.totalorder %s31, 0
    %p352 = por %p350, %p351
    %s353 = ssub.s32 %s25, %s32
    %p354 = scmp.eq.s32.totalorder %s353, 0
    %s356 = sadd.s32 %s355, 1
    %s357 = scalar_select %p354, %s355, %s356
    %p360 = pneg %p354
    %p361 = scmp.eq.s32.totalorder %s25, 1
    %p362 = por %p360, %p361
    %p363 = scmp.ne.s32.totalorder %s355, %s358
    %p364 = scmp.eq.s32.totalorder %s25, 0
    %p365 = por %p363, %p364
    %p366 = scmp.ne.s32.totalorder %s355, %s358
    %p367 = scmp.eq.s32.totalorder %s30, 1
    %p368 = por %p366, %p367
    %p369 = scmp.ne.s32.totalorder %s358, %s359
    %p370 = scmp.eq.s32.totalorder %s30, 0
    %p371 = por %p369, %p370
    %p372 = scmp.ne.s32.totalorder %s358, %s359
    %p373 = scmp.eq.s32.totalorder %s31, 1
    %p374 = por %p372, %p373
    %p376 = scmp.ne.s32.totalorder %s359, %s375
    %p377 = scmp.eq.s32.totalorder %s31, 0
    %p378 = por %p376, %p377
    %s379 = ssub.s32 %s25, %s32
    %p380 = scmp.eq.s32.totalorder %s379, 0
    %s382 = sadd.s32 %s381, 1
    %s383 = scalar_select %p380, %s381, %s382
    %p386 = pneg %p380
    %p387 = scmp.eq.s32.totalorder %s25, 1
    %p388 = por %p386, %p387
    %p389 = scmp.ne.s32.totalorder %s381, %s384
    %p390 = scmp.eq.s32.totalorder %s25, 0
    %p391 = por %p389, %p390
    %p392 = scmp.ne.s32.totalorder %s381, %s384
    %p393 = scmp.eq.s32.totalorder %s30, 1
    %p394 = por %p392, %p393
    %p395 = scmp.ne.s32.totalorder %s384, %s385
    %p396 = scmp.eq.s32.totalorder %s30, 0
    %p397 = por %p395, %p396
    %p398 = scmp.ne.s32.totalorder %s384, %s385
    %p399 = scmp.eq.s32.totalorder %s31, 1
    %p400 = por %p398, %p399
    %p402 = scmp.ne.s32.totalorder %s385, %s401
    %p403 = scmp.eq.s32.totalorder %s31, 0
    %p404 = por %p402, %p403
    %p405 = scmp.le.s32.totalorder 1, %s25
    %p406 = scmp.lt.s32.totalorder %s25, 3
    %p407 = pnand %p405, %p406
    %p408 = pneg %p407
    // Predicated region
    $region9: #{net_forward.1} parent=5 // pred_check
      _
    $region10: #{net_forward.1} parent=5 // pred_check_branch
      %410 = sbr.rel (%p407) target = $region12
    $region11: #{net_forward.1} parent=5 // pred_region
      %s411 = ssub.s32 %s25, 1
      // Predicated region
      $region13: #{net_forward.1} parent=11 // pred_check
        %p412 = pneg %p72
      $region14: #{net_forward.1} parent=11 // pred_check_branch
        %414 = sbr.rel (%p412) target = $region16
      $region15: #{net_forward.1} parent=11 // pred_region
        _
      $region16: #{net_forward.1} parent=11 // pred_fallthru
        _
      // Predicated region
      $region17: #{net_forward.1} parent=11 // pred_check
        %p415 = pneg %p93
      $region18: #{net_forward.1} parent=11 // pred_check_branch
        %417 = sbr.rel (%p415) target = $region20
      $region19: #{net_forward.1} parent=11 // pred_region
        _
      $region20: #{net_forward.1} parent=11 // pred_fallthru
        _
      // Predicated region
      $region21: #{net_forward.1} parent=11 // pred_check
        %p418 = pneg %p114
      $region22: #{net_forward.1} parent=11 // pred_check_branch
        %420 = sbr.rel (%p418) target = $region24
      $region23: #{net_forward.1} parent=11 // pred_region
        _
      $region24: #{net_forward.1} parent=11 // pred_fallthru
        _
      // Predicated region
      $region25: #{net_forward.1} parent=11 // pred_check
        %p421 = pneg %p135
      $region26: #{net_forward.1} parent=11 // pred_check_branch
        %423 = sbr.rel (%p421) target = $region28
      $region27: #{net_forward.1} parent=11 // pred_region
        _
      $region28: #{net_forward.1} parent=11 // pred_fallthru
        _
      // Predicated region
      $region29: #{net_forward.1} parent=11 // pred_check
        %p424 = pneg %p156
      $region30: #{net_forward.1} parent=11 // pred_check_branch
        %426 = sbr.rel (%p424) target = $region32
      $region31: #{net_forward.1} parent=11 // pred_region
        _
      $region32: #{net_forward.1} parent=11 // pred_fallthru
        _
      // Predicated region
      $region33: #{net_forward.1} parent=11 // pred_check
        %p427 = pneg %p177
      $region34: #{net_forward.1} parent=11 // pred_check_branch
        %429 = sbr.rel (%p427) target = $region36
      $region35: #{net_forward.1} parent=11 // pred_region
        _
      $region36: #{net_forward.1} parent=11 // pred_fallthru
        _
      // Predicated region
      $region37: #{net_forward.1} parent=11 // pred_check
        %p430 = pneg %p198
      $region38: #{net_forward.1} parent=11 // pred_check_branch
        %432 = sbr.rel (%p430) target = $region40
      $region39: #{net_forward.1} parent=11 // pred_region
        _
      $region40: #{net_forward.1} parent=11 // pred_fallthru
        _
      // Predicated region
      $region41: #{net_forward.1} parent=11 // pred_check
        %p433 = pneg %p219
      $region42: #{net_forward.1} parent=11 // pred_check_branch
        %435 = sbr.rel (%p433) target = $region44
      $region43: #{net_forward.1} parent=11 // pred_region
        _
      $region44: #{net_forward.1} parent=11 // pred_fallthru
        _
      // Predicated region
      $region45: #{net_forward.1} parent=11 // pred_check
        %p436 = pneg %p240
      $region46: #{net_forward.1} parent=11 // pred_check_branch
        %438 = sbr.rel (%p436) target = $region48
      $region47: #{net_forward.1} parent=11 // pred_region
        _
      $region48: #{net_forward.1} parent=11 // pred_fallthru
        _
      // Predicated region
      $region49: #{net_forward.1} parent=11 // pred_check
        %p439 = pneg %p261
      $region50: #{net_forward.1} parent=11 // pred_check_branch
        %441 = sbr.rel (%p439) target = $region52
      $region51: #{net_forward.1} parent=11 // pred_region
        _
      $region52: #{net_forward.1} parent=11 // pred_fallthru
        _
      // Predicated region
      $region53: #{net_forward.1} parent=11 // pred_check
        %p442 = pneg %p282
      $region54: #{net_forward.1} parent=11 // pred_check_branch
        %444 = sbr.rel (%p442) target = $region56
      $region55: #{net_forward.1} parent=11 // pred_region
        _
      $region56: #{net_forward.1} parent=11 // pred_fallthru
        _
      // Predicated region
      $region57: #{net_forward.1} parent=11 // pred_check
        %p445 = pneg %p303
      $region58: #{net_forward.1} parent=11 // pred_check_branch
        %447 = sbr.rel (%p445) target = $region60
      $region59: #{net_forward.1} parent=11 // pred_region
        _
      $region60: #{net_forward.1} parent=11 // pred_fallthru
        _
      // Predicated region
      $region61: #{net_forward.1} parent=11 // pred_check
        %p448 = pneg %p324
      $region62: #{net_forward.1} parent=11 // pred_check_branch
        %450 = sbr.rel (%p448) target = $region64
      $region63: #{net_forward.1} parent=11 // pred_region
        _
      $region64: #{net_forward.1} parent=11 // pred_fallthru
        _
      // Predicated region
      $region65: #{net_forward.1} parent=11 // pred_check
        %p451 = pneg %p345
      $region66: #{net_forward.1} parent=11 // pred_check_branch
        %453 = sbr.rel (%p451) target = $region68
      $region67: #{net_forward.1} parent=11 // pred_region
        _
      $region68: #{net_forward.1} parent=11 // pred_fallthru
        _
    $region12: #{net_forward.1} parent=5 // pred_fallthru
      _
    %p454 = scmp.lt.s32.totalorder %s25, 2
    // Predicated region
    $region69: #{net_forward.1} parent=5 // pred_check
      %p455 = pneg %p454
    $region70: #{net_forward.1} parent=5 // pred_check_branch
      %457 = sbr.rel (%p455) target = $region72
    $region71: #{net_forward.1} parent=5 // pred_region
      // Predicated region
      $region73: #{net_forward.1} parent=71 // pred_check
        %p458 = pneg %p45
      $region74: #{net_forward.1} parent=71 // pred_check_branch
        %460 = sbr.rel (%p458) target = $region76
      $region75: #{net_forward.1} parent=71 // pred_region
        %p461 = scmp.lt.s32.totalorder %s25, 1
        %s462 = scalar_select %p461, %s25, 1
        %s463 = smul.addr %s462, 2
        %s464 = smul.addr %s463, 8
        %s465 = scalar_lea.vmem %s0, %s464
      $region76: #{net_forward.1} parent=71 // pred_fallthru
        _
    $region72: #{net_forward.1} parent=5 // pred_fallthru
      _
    %p466 = scmp.le.s32.totalorder 1, %s25
    %p467 = scmp.lt.s32.totalorder %s25, 3
    %p468 = pnand %p466, %p467
    %p469 = pneg %p468
    // Predicated region
    $region77: #{net_forward.1} parent=5 // pred_check
      _
    $region78: #{net_forward.1} parent=5 // pred_check_branch
      %471 = sbr.rel (%p468) target = $region80
    $region79: #{net_forward.1} parent=5 // pred_region
      %s472 = ssub.s32 %s25, 1
      %p473 = scmp.lt.s32.totalorder %s30, 1
      %s474 = scalar_select %p473, %s30, 1
      %s475 = smul.addr %s474, 2
      %s476 = smul.addr %s475, 8
      %s477 = scalar_lea.vmem %s0, %s476
      %p478 = pneg %p51
      %p479 = pneg %p48
      %p480 = pneg %p72
      %p481 = pneg %p69
      %p482 = pneg %p93
      %p483 = pneg %p90
      %p484 = pneg %p114
      %p485 = pneg %p111
      %p486 = pneg %p135
      %p487 = pneg %p132
      %p488 = pneg %p156
      %p489 = pneg %p153
      %p490 = pneg %p177
      %p491 = pneg %p174
      %p492 = pneg %p198
      %p493 = pneg %p195
      %p494 = pneg %p219
      %p495 = pneg %p216
      %p496 = pneg %p240
      %p497 = pneg %p237
      %p498 = pneg %p261
      %p499 = pneg %p258
      %p500 = pneg %p282
      %p501 = pneg %p279
      %p502 = pneg %p303
      %p503 = pneg %p300
      %p504 = pneg %p324
      %p505 = pneg %p321
      %p506 = pneg %p345
      %p507 = pneg %p342
      %p508 = pneg %p371
      %p509 = pneg %p368
      %p510 = scmp.lt.s32.totalorder %s30, 1
      %s511 = scalar_select %p510, %s30, 1
      %s512 = scalar_lea.vmem %s15, %s511
      %p513 = pneg %p397
      %p514 = pneg %p394
      %p515 = scmp.lt.s32.totalorder %s30, 1
      %s516 = scalar_select %p515, %s30, 1
      %s517 = smul.addr %s516, 2
      %s518 = scalar_lea.vmem %s16, %s517
      %p519 = scmp.lt.s32.totalorder %s30, 1
      %s520 = scalar_select %p519, %s30, 1
      %s521 = smul.addr %s520, 2
      %s522 = smul.addr %s521, 8
      %s523 = scalar_lea.vmem %s0, %s522
      %p524 = scmp.lt.s32.totalorder %s30, 1
      %s525 = scalar_select %p524, %s30, 1
      %s526 = scalar_lea.vmem %s15, %s525
      %p527 = scmp.lt.s32.totalorder %s30, 1
      %s528 = scalar_select %p527, %s30, 1
      %s529 = smul.addr %s528, 2
      %s530 = scalar_lea.vmem %s16, %s529
      %v531 = vld [vmem:[%s523] sm:$0xff]
      %v532 = vld [vmem:[%s523 + $0x8] sm:$0xff]
      %v533 = vld [vmem:[%s1] sm:$0xff]
      %v534 = vld [vmem:[%s1 + $0x8] sm:$0xff]
      %s535 = scalar_lea.vmem %s1, 16
      %v536 = vld [vmem:[%s535] sm:$0xff]
      %v537 = vld [vmem:[%s535 + $0x8] sm:$0xff]
      %vm540 = vcmask 1046528
      %v541 = vrot.slane %v531, 1
      %v542 = vrot.slane %v532, 1
      %v543 = vsel %vm540, %v541, %v542
      %vm544 = vcmask 130048
      %v545 = vsel %vm544, %v543, 0
      %v547 = vsel %vm544, %v542, 0
      %549 = vmatprep.subr.mxu0 0.0
      %550 = vmatpush1.msra.mxu0 %v536
      %551 = vmatprep.subr.mxu0 0.0
      %552 = vmatpush1.msra.mxu0 %v537
      %553 = vmatprep.subr.mxu0 0.0
      %554 = vmatpush1.msra.mxu0 0.0
      %555 = vmatprep.subr.mxu0 0.0
      %556 = vmatpush1.msra.mxu0 0.0
      %557 = vmatprep.subr.mxu0 0.0
      %558 = vmatpush1.msra.mxu0 0.0
      %559 = vmatprep.subr.mxu0 0.0
      %560 = vmatpush1.msra.mxu0 0.0
      %561 = vmatprep.subr.mxu0 0.0
      %562 = vmatpush1.msra.mxu0 0.0
      %563 = vmatprep.subr.mxu0 0.0
      %564 = vmatpush1.msra.mxu0 0.0
      %565 = vmatprep.subr.mxu0 0.0
      %566 = vmatpush1.msra.mxu0 0.0
      %567 = vmatprep.subr.mxu0 0.0
      %568 = vmatpush1.msra.mxu0 0.0
      %569 = vmatprep.subr.mxu0 0.0
      %570 = vmatpush1.msra.mxu0 0.0
      %571 = vmatprep.subr.mxu0 0.0
      %572 = vmatpush1.msra.mxu0 0.0
      %573 = vmatprep.subr.mxu0 0.0
      %574 = vmatpush1.msra.mxu0 0.0
      %575 = vmatprep.subr.mxu0 0.0
      %576 = vmatpush1.msra.mxu0 0.0
      %577 = vmatprep.subr.mxu0 0.0
      %578 = vmatpush1.msra.mxu0 0.0
      %579 = vmatprep.subr.mxu0 0.0
      %580 = vmatpush1.msra.mxu0 0.0
      %581 = vmatprep.subr.mxu0 0.0
      %582 = vmatpush1.msra.mxu0 0.0
      %583 = vmatprep.subr.mxu0 0.0
      %584 = vmatpush1.msra.mxu0 0.0
      %585 = vmatprep.subr.mxu0 0.0
      %586 = vmatpush1.msra.mxu0 0.0
      %587 = vmatprep.subr.mxu0 0.0
      %588 = vmatpush1.msra.mxu0 0.0
      %589 = vmatprep.subr.mxu0 0.0
      %590 = vmatpush1.msra.mxu0 0.0
      %591 = vmatprep.subr.mxu0 0.0
      %592 = vmatpush1.msra.mxu0 0.0
      %593 = vmatprep.subr.mxu0 0.0
      %594 = vmatpush1.msra.mxu0 0.0
      %595 = vmatprep.subr.mxu0 0.0
      %596 = vmatpush1.msra.mxu0 0.0
      %597 = vmatprep.subr.mxu0 0.0
      %598 = vmatpush1.msra.mxu0 0.0
      %599 = vmatprep.subr.mxu0 0.0
      %600 = vmatpush1.msra.mxu0 0.0
      %601 = vmatprep.subr.mxu0 0.0
      %602 = vmatpush1.msra.mxu0 0.0
      %603 = vmatprep.subr.mxu0 0.0
      %604 = vmatpush1.msra.mxu0 0.0
      %605 = vmatprep.subr.mxu0 0.0
      %606 = vmatpush1.msra.mxu0 0.0
      %607 = vmatprep.subr.mxu0 0.0
      %608 = vmatpush1.msra.mxu0 0.0
      %609 = vmatprep.subr.mxu0 0.0
      %610 = vmatpush1.msra.mxu0 0.0
      %611 = vmatprep.subr.mxu0 0.0
      %612 = vmatpush1.msra.mxu0 0.0
      %613 = vmatprep.mubr.f32.mxu0 0.0
      %614 = vmatmul.mubr.f32.gmra.mrb[0].mxu0 %v545
      %v615 = vpop.f32.mrb[0].mxu0
      %v616 = vadd.f32 0.0, %v615
      %v617 = vpop.f32.mrb[0].mxu0
      %618 = vmatprep.mubr.f32.mxu0 0.0
      %619 = vmatmul.mubr.f32.gmra.mrb[0].mxu0 %v547
      %v620 = vpop.f32.mrb[0].mxu0
      %v621 = vadd.f32 0.0, %v620
      %v622 = vpop.f32.mrb[0].mxu0
      %623 = vdwg.mxu0
      %v624 = vsel %vm544, %v531, 0
      %v626 = vsel %vm544, %v532, 0
      %628 = vmatprep.subr.mxu0 0.0
      %629 = vmatpush1.msra.mxu0 %v533
      %630 = vmatprep.subr.mxu0 0.0
      %631 = vmatpush1.msra.mxu0 %v534
      %632 = vmatprep.subr.mxu0 0.0
      %633 = vmatpush1.msra.mxu0 0.0
      %634 = vmatprep.subr.mxu0 0.0
      %635 = vmatpush1.msra.mxu0 0.0
      %636 = vmatprep.subr.mxu0 0.0
      %637 = vmatpush1.msra.mxu0 0.0
      %638 = vmatprep.subr.mxu0 0.0
      %639 = vmatpush1.msra.mxu0 0.0
      %640 = vmatprep.subr.mxu0 0.0
      %641 = vmatpush1.msra.mxu0 0.0
      %642 = vmatprep.subr.mxu0 0.0
      %643 = vmatpush1.msra.mxu0 0.0
      %644 = vmatprep.subr.mxu0 0.0
      %645 = vmatpush1.msra.mxu0 0.0
      %646 = vmatprep.subr.mxu0 0.0
      %647 = vmatpush1.msra.mxu0 0.0
      %648 = vmatprep.subr.mxu0 0.0
      %649 = vmatpush1.msra.mxu0 0.0
      %650 = vmatprep.subr.mxu0 0.0
      %651 = vmatpush1.msra.mxu0 0.0
      %652 = vmatprep.subr.mxu0 0.0
      %653 = vmatpush1.msra.mxu0 0.0
      %654 = vmatprep.subr.mxu0 0.0
      %655 = vmatpush1.msra.mxu0 0.0
      %656 = vmatprep.subr.mxu0 0.0
      %657 = vmatpush1.msra.mxu0 0.0
      %658 = vmatprep.subr.mxu0 0.0
      %659 = vmatpush1.msra.mxu0 0.0
      %660 = vmatprep.subr.mxu0 0.0
      %661 = vmatpush1.msra.mxu0 0.0
      %662 = vmatprep.subr.mxu0 0.0
      %663 = vmatpush1.msra.mxu0 0.0
      %664 = vmatprep.subr.mxu0 0.0
      %665 = vmatpush1.msra.mxu0 0.0
      %666 = vmatprep.subr.mxu0 0.0
      %667 = vmatpush1.msra.mxu0 0.0
      %668 = vmatprep.subr.mxu0 0.0
      %669 = vmatpush1.msra.mxu0 0.0
      %670 = vmatprep.subr.mxu0 0.0
      %671 = vmatpush1.msra.mxu0 0.0
      %672 = vmatprep.subr.mxu0 0.0
      %673 = vmatpush1.msra.mxu0 0.0
      %674 = vmatprep.subr.mxu0 0.0
      %675 = vmatpush1.msra.mxu0 0.0
      %676 = vmatprep.subr.mxu0 0.0
      %677 = vmatpush1.msra.mxu0 0.0
      %678 = vmatprep.subr.mxu0 0.0
      %679 = vmatpush1.msra.mxu0 0.0
      %680 = vmatprep.subr.mxu0 0.0
      %681 = vmatpush1.msra.mxu0 0.0
      %682 = vmatprep.subr.mxu0 0.0
      %683 = vmatpush1.msra.mxu0 0.0
      %684 = vmatprep.subr.mxu0 0.0
      %685 = vmatpush1.msra.mxu0 0.0
      %686 = vmatprep.subr.mxu0 0.0
      %687 = vmatpush1.msra.mxu0 0.0
      %688 = vmatprep.subr.mxu0 0.0
      %689 = vmatpush1.msra.mxu0 0.0
      %690 = vmatprep.subr.mxu0 0.0
      %691 = vmatpush1.msra.mxu0 0.0
      %692 = vmatprep.mubr.f32.mxu0 0.0
      %693 = vmatmul.mubr.f32.gmra.mrb[0].mxu0 %v624
      %v694 = vpop.f32.mrb[0].mxu0
      %v695 = vadd.f32 %v616, %v694
      %v696 = vpop.f32.mrb[0].mxu0
      %697 = vmatprep.mubr.f32.mxu0 0.0
      %698 = vmatmul.mubr.f32.gmra.mrb[0].mxu0 %v626
      %v699 = vpop.f32.mrb[0].mxu0
      %v700 = vadd.f32 %v621, %v699
      %v701 = vpop.f32.mrb[0].mxu0
      %702 = vdwg.mxu0
      %s703 = scalar_lea.vmem %s1, 32
      %v704 = vld [vmem:[%s703] sm:$0xff]
      %v705 = vld [vmem:[%s703 + $0x8] sm:$0xff]
      %vm706 = vcmask 1045504
      %v707 = vrot.slane %v531, 2
      %v708 = vrot.slane %v532, 2
      %v709 = vsel %vm706, %v707, %v708
      %v710 = vsel %vm544, %v709, 0
      %v712 = vsel %vm544, %v708, 0
      %714 = vmatprep.subr.mxu0 0.0
      %715 = vmatpush1.msra.mxu0 %v704
      %716 = vmatprep.subr.mxu0 0.0
      %717 = vmatpush1.msra.mxu0 %v705
      %718 = vmatprep.subr.mxu0 0.0
      %719 = vmatpush1.msra.mxu0 0.0
      %720 = vmatprep.subr.mxu0 0.0
      %721 = vmatpush1.msra.mxu0 0.0
      %722 = vmatprep.subr.mxu0 0.0
      %723 = vmatpush1.msra.mxu0 0.0
      %724 = vmatprep.subr.mxu0 0.0
      %725 = vmatpush1.msra.mxu0 0.0
      %726 = vmatprep.subr.mxu0 0.0
      %727 = vmatpush1.msra.mxu0 0.0
      %728 = vmatprep.subr.mxu0 0.0
      %729 = vmatpush1.msra.mxu0 0.0
      %730 = vmatprep.subr.mxu0 0.0
      %731 = vmatpush1.msra.mxu0 0.0
      %732 = vmatprep.subr.mxu0 0.0
      %733 = vmatpush1.msra.mxu0 0.0
      %734 = vmatprep.subr.mxu0 0.0
      %735 = vmatpush1.msra.mxu0 0.0
      %736 = vmatprep.subr.mxu0 0.0
      %737 = vmatpush1.msra.mxu0 0.0
      %738 = vmatprep.subr.mxu0 0.0
      %739 = vmatpush1.msra.mxu0 0.0
      %740 = vmatprep.subr.mxu0 0.0
      %741 = vmatpush1.msra.mxu0 0.0
      %742 = vmatprep.subr.mxu0 0.0
      %743 = vmatpush1.msra.mxu0 0.0
      %744 = vmatprep.subr.mxu0 0.0
      %745 = vmatpush1.msra.mxu0 0.0
      %746 = vmatprep.subr.mxu0 0.0
      %747 = vmatpush1.msra.mxu0 0.0
      %748 = vmatprep.subr.mxu0 0.0
      %749 = vmatpush1.msra.mxu0 0.0
      %750 = vmatprep.subr.mxu0 0.0
      %751 = vmatpush1.msra.mxu0 0.0
      %752 = vmatprep.subr.mxu0 0.0
      %753 = vmatpush1.msra.mxu0 0.0
      %754 = vmatprep.subr.mxu0 0.0
      %755 = vmatpush1.msra.mxu0 0.0
      %756 = vmatprep.subr.mxu0 0.0
      %757 = vmatpush1.msra.mxu0 0.0
      %758 = vmatprep.subr.mxu0 0.0
      %759 = vmatpush1.msra.mxu0 0.0
      %760 = vmatprep.subr.mxu0 0.0
      %761 = vmatpush1.msra.mxu0 0.0
      %762 = vmatprep.subr.mxu0 0.0
      %763 = vmatpush1.msra.mxu0 0.0
      %764 = vmatprep.subr.mxu0 0.0
      %765 = vmatpush1.msra.mxu0 0.0
      %766 = vmatprep.subr.mxu0 0.0
      %767 = vmatpush1.msra.mxu0 0.0
      %768 = vmatprep.subr.mxu0 0.0
      %769 = vmatpush1.msra.mxu0 0.0
      %770 = vmatprep.subr.mxu0 0.0
      %771 = vmatpush1.msra.mxu0 0.0
      %772 = vmatprep.subr.mxu0 0.0
      %773 = vmatpush1.msra.mxu0 0.0
      %774 = vmatprep.subr.mxu0 0.0
      %775 = vmatpush1.msra.mxu0 0.0
      %776 = vmatprep.subr.mxu0 0.0
      %777 = vmatpush1.msra.mxu0 0.0
      %778 = vmatprep.mubr.f32.mxu0 0.0
      %779 = vmatmul.mubr.f32.gmra.mrb[0].mxu0 %v710
      %v780 = vpop.f32.mrb[0].mxu0
      %v781 = vadd.f32 0.0, %v780
      %v782 = vpop.f32.mrb[0].mxu0
      %783 = vmatprep.mubr.f32.mxu0 0.0
      %784 = vmatmul.mubr.f32.gmra.mrb[0].mxu0 %v712
      %v785 = vpop.f32.mrb[0].mxu0
      %v786 = vadd.f32 0.0, %v785
      %v787 = vpop.f32.mrb[0].mxu0
      %788 = vdwg.mxu0
      %v789 = vadd.f32 %v695, %v781
      %v790 = vadd.f32 %v700, %v786
      %v791 = vld [vmem:[%s2] sm:$0x1]
      %v793 = vlaneseq
      %v794 = vshrl.u32 %v793, 7
      %v795 = vsub.s32 0, %v794
      %v796 = vrot.slane %v791, %v795
      %v798 = vadd.f32 %v789, %v796
      %v799 = vadd.f32 %v790, %v796
      %v800 = vmax.f32 %v798, 0.0
      %v801 = vmax.f32 %v799, 0.0
      %v802 = vld [vmem:[%s3] sm:$0x7f]
      %vm803 = vcmask 113664
      %v805 = vsel %vm803, %v802, 0
      %v808 = vsel %vm706, %v801, 0
      %810 = vmatprep.subr.mxu0 0.0
      %811 = vmatpush1.msra.mxu0 %v800
      %812 = vmatprep.subr.mxu0 0.0
      %813 = vmatpush1.msra.mxu0 %v808
      %814 = vmatprep.subr.mxu0 0.0
      %815 = vmatpush1.msra.mxu0 0.0
      %816 = vmatprep.subr.mxu0 0.0
      %817 = vmatpush1.msra.mxu0 0.0
      %818 = vmatprep.subr.mxu0 0.0
      %819 = vmatpush1.msra.mxu0 0.0
      %820 = vmatprep.subr.mxu0 0.0
      %821 = vmatpush1.msra.mxu0 0.0
      %822 = vmatprep.subr.mxu0 0.0
      %823 = vmatpush1.msra.mxu0 0.0
      %824 = vmatprep.subr.mxu0 0.0
      %825 = vmatpush1.msra.mxu0 0.0
      %826 = vmatprep.subr.mxu0 0.0
      %827 = vmatpush1.msra.mxu0 0.0
      %828 = vmatprep.subr.mxu0 0.0
      %829 = vmatpush1.msra.mxu0 0.0
      %830 = vmatprep.subr.mxu0 0.0
      %831 = vmatpush1.msra.mxu0 0.0
      %832 = vmatprep.subr.mxu0 0.0
      %833 = vmatpush1.msra.mxu0 0.0
      %834 = vmatprep.subr.mxu0 0.0
      %835 = vmatpush1.msra.mxu0 0.0
      %836 = vmatprep.subr.mxu0 0.0
      %837 = vmatpush1.msra.mxu0 0.0
      %838 = vmatprep.subr.mxu0 0.0
      %839 = vmatpush1.msra.mxu0 0.0
      %840 = vmatprep.subr.mxu0 0.0
      %841 = vmatpush1.msra.mxu0 0.0
      %842 = vmatprep.subr.mxu0 0.0
      %843 = vmatpush1.msra.mxu0 0.0
      %844 = vmatprep.subr.mxu0 0.0
      %845 = vmatpush1.msra.mxu0 0.0
      %846 = vmatprep.subr.mxu0 0.0
      %847 = vmatpush1.msra.mxu0 0.0
      %848 = vmatprep.subr.mxu0 0.0
      %849 = vmatpush1.msra.mxu0 0.0
      %850 = vmatprep.subr.mxu0 0.0
      %851 = vmatpush1.msra.mxu0 0.0
      %852 = vmatprep.subr.mxu0 0.0
      %853 = vmatpush1.msra.mxu0 0.0
      %854 = vmatprep.subr.mxu0 0.0
      %855 = vmatpush1.msra.mxu0 0.0
      %856 = vmatprep.subr.mxu0 0.0
      %857 = vmatpush1.msra.mxu0 0.0
      %858 = vmatprep.subr.mxu0 0.0
      %859 = vmatpush1.msra.mxu0 0.0
      %860 = vmatprep.subr.mxu0 0.0
      %861 = vmatpush1.msra.mxu0 0.0
      %862 = vmatprep.subr.mxu0 0.0
      %863 = vmatpush1.msra.mxu0 0.0
      %864 = vmatprep.subr.mxu0 0.0
      %865 = vmatpush1.msra.mxu0 0.0
      %866 = vmatprep.subr.mxu0 0.0
      %867 = vmatpush1.msra.mxu0 0.0
      %868 = vmatprep.subr.mxu0 0.0
      %869 = vmatpush1.msra.mxu0 0.0
      %870 = vmatprep.subr.mxu0 0.0
      %871 = vmatpush1.msra.mxu0 0.0
      %872 = vmatprep.subr.mxu0 0.0
      %873 = vmatpush1.msra.mxu0 0.0
      %874 = vmatprep.mubr.f32.mxu0 0.0
      %875 = vmatmul.mubr.f32.gmra.mrb[0].mxu0 %v805
      %v876 = vpop.f32.mrb[0].mxu0
      %v877 = vadd.f32 0.0, %v876
      %v878 = vpop.f32.mrb[0].mxu0
      %879 = vdwg.mxu0
      %s880 = scalar_lea.vmem %s3, 8
      %v881 = vld [vmem:[%s880] sm:$0x7f]
      %v883 = vsel %vm803, %v881, 0
      %885 = vmatprep.subr.mxu0 0.0
      %886 = vmatpush1.msra.mxu0 %v800
      %887 = vmatprep.subr.mxu0 0.0
      %888 = vmatpush1.msra.mxu0 %v808
      %889 = vmatprep.subr.mxu0 0.0
      %890 = vmatpush1.msra.mxu0 0.0
      %891 = vmatprep.subr.mxu0 0.0
      %892 = vmatpush1.msra.mxu0 0.0
      %893 = vmatprep.subr.mxu0 0.0
      %894 = vmatpush1.msra.mxu0 0.0
      %895 = vmatprep.subr.mxu0 0.0
      %896 = vmatpush1.msra.mxu0 0.0
      %897 = vmatprep.subr.mxu0 0.0
      %898 = vmatpush1.msra.mxu0 0.0
      %899 = vmatprep.subr.mxu0 0.0
      %900 = vmatpush1.msra.mxu0 0.0
      %901 = vmatprep.subr.mxu0 0.0
      %902 = vmatpush1.msra.mxu0 0.0
      %903 = vmatprep.subr.mxu0 0.0
      %904 = vmatpush1.msra.mxu0 0.0
      %905 = vmatprep.subr.mxu0 0.0
      %906 = vmatpush1.msra.mxu0 0.0
      %907 = vmatprep.subr.mxu0 0.0
      %908 = vmatpush1.msra.mxu0 0.0
      %909 = vmatprep.subr.mxu0 0.0
      %910 = vmatpush1.msra.mxu0 0.0
      %911 = vmatprep.subr.mxu0 0.0
      %912 = vmatpush1.msra.mxu0 0.0
      %913 = vmatprep.subr.mxu0 0.0
      %914 = vmatpush1.msra.mxu0 0.0
      %915 = vmatprep.subr.mxu0 0.0
      %916 = vmatpush1.msra.mxu0 0.0
      %917 = vmatprep.subr.mxu0 0.0
      %918 = vmatpush1.msra.mxu0 0.0
      %919 = vmatprep.subr.mxu0 0.0
      %920 = vmatpush1.msra.mxu0 0.0
      %921 = vmatprep.subr.mxu0 0.0
      %922 = vmatpush1.msra.mxu0 0.0
      %923 = vmatprep.subr.mxu0 0.0
      %924 = vmatpush1.msra.mxu0 0.0
      %925 = vmatprep.subr.mxu0 0.0
      %926 = vmatpush1.msra.mxu0 0.0
      %927 = vmatprep.subr.mxu0 0.0
      %928 = vmatpush1.msra.mxu0 0.0
      %929 = vmatprep.subr.mxu0 0.0
      %930 = vmatpush1.msra.mxu0 0.0
      %931 = vmatprep.subr.mxu0 0.0
      %932 = vmatpush1.msra.mxu0 0.0
      %933 = vmatprep.subr.mxu0 0.0
      %934 = vmatpush1.msra.mxu0 0.0
      %935 = vmatprep.subr.mxu0 0.0
      %936 = vmatpush1.msra.mxu0 0.0
      %937 = vmatprep.subr.mxu0 0.0
      %938 = vmatpush1.msra.mxu0 0.0
      %939 = vmatprep.subr.mxu0 0.0
      %940 = vmatpush1.msra.mxu0 0.0
      %941 = vmatprep.subr.mxu0 0.0
      %942 = vmatpush1.msra.mxu0 0.0
      %943 = vmatprep.subr.mxu0 0.0
      %944 = vmatpush1.msra.mxu0 0.0
      %945 = vmatprep.subr.mxu0 0.0
      %946 = vmatpush1.msra.mxu0 0.0
      %947 = vmatprep.subr.mxu0 0.0
      %948 = vmatpush1.msra.mxu0 0.0
      %949 = vmatprep.mubr.f32.mxu0 0.0
      %950 = vmatmul.mubr.f32.gmra.mrb[0].mxu0 %v883
      %v951 = vpop.f32.mrb[0].mxu0
      %v952 = vadd.f32 0.0, %v951
      %v953 = vpop.f32.mrb[0].mxu0
      %954 = vdwg.mxu0
      %v955 = vmax.f32 %v877, %v952
      %v956 = vld [vmem:[%s4] sm:$0xff]
      %v957 = vld [vmem:[%s4 + $0x8] sm:$0xff]
      %v958 = vld [vmem:[%s4 + $0x10] sm:$0xff]
      %v959 = vld [vmem:[%s4 + $0x18] sm:$0xff]
      %v960 = vld [vmem:[%s4 + $0x20] sm:$0xff]
      %v961 = vld [vmem:[%s4 + $0x28] sm:$0xff]
      %v962 = vld [vmem:[%s4 + $0x30] sm:$0xff]
      %v963 = vld [vmem:[%s4 + $0x38] sm:$0xff]
      %v964 = vld [vmem:[%s4 + $0x40] sm:$0xff]
      %v965 = vld [vmem:[%s4 + $0x48] sm:$0xff]
      %v966 = vld [vmem:[%s4 + $0x50] sm:$0xff]
      %v967 = vld [vmem:[%s4 + $0x58] sm:$0xff]
      %v968 = vld [vmem:[%s4 + $0x60] sm:$0xff]
      %v969 = vld [vmem:[%s4 + $0x68] sm:$0xff]
      %vm970 = vcmask 916480
      %v972 = vsel %vm970, %v955, 0
      %974 = vmatprep.subr.mxu0 0.0
      %975 = vmatpush1.msra.mxu0 %v956
      %976 = vmatprep.subr.mxu0 0.0
      %977 = vmatpush1.msra.mxu0 %v957
      %978 = vmatprep.subr.mxu0 0.0
      %979 = vmatpush1.msra.mxu0 %v958
      %980 = vmatprep.subr.mxu0 0.0
      %981 = vmatpush1.msra.mxu0 %v959
      %982 = vmatprep.subr.mxu0 0.0
      %983 = vmatpush1.msra.mxu0 %v960
      %984 = vmatprep.subr.mxu0 0.0
      %985 = vmatpush1.msra.mxu0 %v961
      %986 = vmatprep.subr.mxu0 0.0
      %987 = vmatpush1.msra.mxu0 %v962
      %988 = vmatprep.subr.mxu0 0.0
      %989 = vmatpush1.msra.mxu0 %v963
      %990 = vmatprep.subr.mxu0 0.0
      %991 = vmatpush1.msra.mxu0 %v964
      %992 = vmatprep.subr.mxu0 0.0
      %993 = vmatpush1.msra.mxu0 %v965
      %994 = vmatprep.subr.mxu0 0.0
      %995 = vmatpush1.msra.mxu0 %v966
      %996 = vmatprep.subr.mxu0 0.0
      %997 = vmatpush1.msra.mxu0 %v967
      %998 = vmatprep.subr.mxu0 0.0
      %999 = vmatpush1.msra.mxu0 %v968
      %1000 = vmatprep.subr.mxu0 0.0
      %1001 = vmatpush1.msra.mxu0 %v969
      %1002 = vmatprep.subr.mxu0 0.0
      %1003 = vmatpush1.msra.mxu0 0.0
      %1004 = vmatprep.subr.mxu0 0.0
      %1005 = vmatpush1.msra.mxu0 0.0
      %1006 = vmatprep.subr.mxu0 0.0
      %1007 = vmatpush1.msra.mxu0 0.0
      %1008 = vmatprep.subr.mxu0 0.0
      %1009 = vmatpush1.msra.mxu0 0.0
      %1010 = vmatprep.subr.mxu0 0.0
      %1011 = vmatpush1.msra.mxu0 0.0
      %1012 = vmatprep.subr.mxu0 0.0
      %1013 = vmatpush1.msra.mxu0 0.0
      %1014 = vmatprep.subr.mxu0 0.0
      %1015 = vmatpush1.msra.mxu0 0.0
      %1016 = vmatprep.subr.mxu0 0.0
      %1017 = vmatpush1.msra.mxu0 0.0
      %1018 = vmatprep.subr.mxu0 0.0
      %1019 = vmatpush1.msra.mxu0 0.0
      %1020 = vmatprep.subr.mxu0 0.0
      %1021 = vmatpush1.msra.mxu0 0.0
      %1022 = vmatprep.subr.mxu0 0.0
      %1023 = vmatpush1.msra.mxu0 0.0
      %1024 = vmatprep.subr.mxu0 0.0
      %1025 = vmatpush1.msra.mxu0 0.0
      %1026 = vmatprep.subr.mxu0 0.0
      %1027 = vmatpush1.msra.mxu0 0.0
      %1028 = vmatprep.subr.mxu0 0.0
      %1029 = vmatpush1.msra.mxu0 0.0
      %1030 = vmatprep.subr.mxu0 0.0
      %1031 = vmatpush1.msra.mxu0 0.0
      %1032 = vmatprep.subr.mxu0 0.0
      %1033 = vmatpush1.msra.mxu0 0.0
      %1034 = vmatprep.subr.mxu0 0.0
      %1035 = vmatpush1.msra.mxu0 0.0
      %1036 = vmatprep.subr.mxu0 0.0
      %1037 = vmatpush1.msra.mxu0 0.0
      %1038 = vmatprep.mubr.f32.mxu0 0.0
      %1039 = vmatmul.mubr.f32.gmra.mrb[0].mxu0 %v972
      %v1040 = vpop.f32.mrb[0].mxu0
      %v1041 = vadd.f32 0.0, %v1040
      %v1042 = vpop.f32.mrb[0].mxu0
      %1043 = vdwg.mxu0
      %s1044 = scalar_lea.vmem %s4, 112
      %v1045 = vld [vmem:[%s1044] sm:$0xff]
      %v1046 = vld [vmem:[%s1044 + $0x8] sm:$0xff]
      %v1047 = vld [vmem:[%s1044 + $0x10] sm:$0xff]
      %v1048 = vld [vmem:[%s1044 + $0x18] sm:$0xff]
      %v1049 = vld [vmem:[%s1044 + $0x20] sm:$0xff]
      %v1050 = vld [vmem:[%s1044 + $0x28] sm:$0xff]
      %v1051 = vld [vmem:[%s1044 + $0x30] sm:$0xff]
      %v1052 = vld [vmem:[%s1044 + $0x38] sm:$0xff]
      %v1053 = vld [vmem:[%s1044 + $0x40] sm:$0xff]
      %v1054 = vld [vmem:[%s1044 + $0x48] sm:$0xff]
      %v1055 = vld [vmem:[%s1044 + $0x50] sm:$0xff]
      %v1056 = vld [vmem:[%s1044 + $0x58] sm:$0xff]
      %v1057 = vld [vmem:[%s1044 + $0x60] sm:$0xff]
      %v1058 = vld [vmem:[%s1044 + $0x68] sm:$0xff]
      %1059 = vmatprep.subr.mxu0 0.0
      %1060 = vmatpush1.msra.mxu0 %v1045
      %1061 = vmatprep.subr.mxu0 0.0
      %1062 = vmatpush1.msra.mxu0 %v1046
      %1063 = vmatprep.subr.mxu0 0.0
      %1064 = vmatpush1.msra.mxu0 %v1047
      %1065 = vmatprep.subr.mxu0 0.0
      %1066 = vmatpush1.msra.mxu0 %v1048
      %1067 = vmatprep.subr.mxu0 0.0
      %1068 = vmatpush1.msra.mxu0 %v1049
      %1069 = vmatprep.subr.mxu0 0.0
      %1070 = vmatpush1.msra.mxu0 %v1050
      %1071 = vmatprep.subr.mxu0 0.0
      %1072 = vmatpush1.msra.mxu0 %v1051
      %1073 = vmatprep.subr.mxu0 0.0
      %1074 = vmatpush1.msra.mxu0 %v1052
      %1075 = vmatprep.subr.mxu0 0.0
      %1076 = vmatpush1.msra.mxu0 %v1053
      %1077 = vmatprep.subr.mxu0 0.0
      %1078 = vmatpush1.msra.mxu0 %v1054
      %1079 = vmatprep.subr.mxu0 0.0
      %1080 = vmatpush1.msra.mxu0 %v1055
      %1081 = vmatprep.subr.mxu0 0.0
      %1082 = vmatpush1.msra.mxu0 %v1056
      %1083 = vmatprep.subr.mxu0 0.0
      %1084 = vmatpush1.msra.mxu0 %v1057
      %1085 = vmatprep.subr.mxu0 0.0
      %1086 = vmatpush1.msra.mxu0 %v1058
      %1087 = vmatprep.subr.mxu0 0.0
      %1088 = vmatpush1.msra.mxu0 0.0
      %1089 = vmatprep.subr.mxu0 0.0
      %1090 = vmatpush1.msra.mxu0 0.0
      %1091 = vmatprep.subr.mxu0 0.0
      %1092 = vmatpush1.msra.mxu0 0.0
      %1093 = vmatprep.subr.mxu0 0.0
      %1094 = vmatpush1.msra.mxu0 0.0
      %1095 = vmatprep.subr.mxu0 0.0
      %1096 = vmatpush1.msra.mxu0 0.0
      %1097 = vmatprep.subr.mxu0 0.0
      %1098 = vmatpush1.msra.mxu0 0.0
      %1099 = vmatprep.subr.mxu0 0.0
      %1100 = vmatpush1.msra.mxu0 0.0
      %1101 = vmatprep.subr.mxu0 0.0
      %1102 = vmatpush1.msra.mxu0 0.0
      %1103 = vmatprep.subr.mxu0 0.0
      %1104 = vmatpush1.msra.mxu0 0.0
      %1105 = vmatprep.subr.mxu0 0.0
      %1106 = vmatpush1.msra.mxu0 0.0
      %1107 = vmatprep.subr.mxu0 0.0
      %1108 = vmatpush1.msra.mxu0 0.0
      %1109 = vmatprep.subr.mxu0 0.0
      %1110 = vmatpush1.msra.mxu0 0.0
      %1111 = vmatprep.subr.mxu0 0.0
      %1112 = vmatpush1.msra.mxu0 0.0
      %1113 = vmatprep.subr.mxu0 0.0
      %1114 = vmatpush1.msra.mxu0 0.0
      %1115 = vmatprep.subr.mxu0 0.0
      %1116 = vmatpush1.msra.mxu0 0.0
      %1117 = vmatprep.subr.mxu0 0.0
      %1118 = vmatpush1.msra.mxu0 0.0
      %1119 = vmatprep.subr.mxu0 0.0
      %1120 = vmatpush1.msra.mxu0 0.0
      %1121 = vmatprep.subr.mxu0 0.0
      %1122 = vmatpush1.msra.mxu0 0.0
      %1123 = vmatprep.mubr.f32.mxu0 0.0
      %1124 = vmatmul.mubr.f32.gmra.mrb[0].mxu0 %v972
      %v1125 = vpop.f32.mrb[0].mxu0
      %v1126 = vadd.f32 0.0, %v1125
      %v1127 = vpop.f32.mrb[0].mxu0
      %1128 = vdwg.mxu0
      %v1129 = vmax.f32 %v1041, %v1126
      %v1130 = vld [vmem:[%s5] sm:$0xff]
      %v1131 = vld [vmem:[%s5 + $0x8] sm:$0xff]
      %v1132 = vld [vmem:[%s5 + $0x10] sm:$0xff]
      %v1133 = vld [vmem:[%s5 + $0x18] sm:$0xff]
      %v1134 = vld [vmem:[%s5 + $0x20] sm:$0xff]
      %v1135 = vld [vmem:[%s5 + $0x28] sm:$0xff]
      %v1136 = vld [vmem:[%s5 + $0x30] sm:$0xff]
      %s1137 = scalar_lea.vmem %s5, 56
      %v1138 = vld [vmem:[%s1137] sm:$0xff]
      %v1139 = vld [vmem:[%s1137 + $0x8] sm:$0xff]
      %v1140 = vld [vmem:[%s1137 + $0x10] sm:$0xff]
      %v1141 = vld [vmem:[%s1137 + $0x18] sm:$0xff]
      %v1142 = vld [vmem:[%s1137 + $0x20] sm:$0xff]
      %v1143 = vld [vmem:[%s1137 + $0x28] sm:$0xff]
      %v1144 = vld [vmem:[%s1137 + $0x30] sm:$0xff]
      %v1146 = vrot.slane %v1129, 1
      %vm1147 = vcmask 457728
      %v1148 = vsel %vm1147, %v1146, 0
      %1150 = vmatprep.subr.mxu0 0.0
      %1151 = vmatpush1.msra.mxu0 %v1138
      %1152 = vmatprep.subr.mxu0 0.0
      %1153 = vmatpush1.msra.mxu0 %v1139
      %1154 = vmatprep.subr.mxu0 0.0
      %1155 = vmatpush1.msra.mxu0 %v1140
      %1156 = vmatprep.subr.mxu0 0.0
      %1157 = vmatpush1.msra.mxu0 %v1141
      %1158 = vmatprep.subr.mxu0 0.0
      %1159 = vmatpush1.msra.mxu0 %v1142
      %1160 = vmatprep.subr.mxu0 0.0
      %1161 = vmatpush1.msra.mxu0 %v1143
      %1162 = vmatprep.subr.mxu0 0.0
      %1163 = vmatpush1.msra.mxu0 %v1144
      %1164 = vmatprep.subr.mxu0 0.0
      %1165 = vmatpush1.msra.mxu0 0.0
      %1166 = vmatprep.subr.mxu0 0.0
      %1167 = vmatpush1.msra.mxu0 0.0
      %1168 = vmatprep.subr.mxu0 0.0
      %1169 = vmatpush1.msra.mxu0 0.0
      %1170 = vmatprep.subr.mxu0 0.0
      %1171 = vmatpush1.msra.mxu0 0.0
      %1172 = vmatprep.subr.mxu0 0.0
      %1173 = vmatpush1.msra.mxu0 0.0
      %1174 = vmatprep.subr.mxu0 0.0
      %1175 = vmatpush1.msra.mxu0 0.0
      %1176 = vmatprep.subr.mxu0 0.0
      %1177 = vmatpush1.msra.mxu0 0.0
      %1178 = vmatprep.subr.mxu0 0.0
      %1179 = vmatpush1.msra.mxu0 0.0
      %1180 = vmatprep.subr.mxu0 0.0
      %1181 = vmatpush1.msra.mxu0 0.0
      %1182 = vmatprep.subr.mxu0 0.0
      %1183 = vmatpush1.msra.mxu0 0.0
      %1184 = vmatprep.subr.mxu0 0.0
      %1185 = vmatpush1.msra.mxu0 0.0
      %1186 = vmatprep.subr.mxu0 0.0
      %1187 = vmatpush1.msra.mxu0 0.0
      %1188 = vmatprep.subr.mxu0 0.0
      %1189 = vmatpush1.msra.mxu0 0.0
      %1190 = vmatprep.subr.mxu0 0.0
      %1191 = vmatpush1.msra.mxu0 0.0
      %1192 = vmatprep.subr.mxu0 0.0
      %1193 = vmatpush1.msra.mxu0 0.0
      %1194 = vmatprep.subr.mxu0 0.0
      %1195 = vmatpush1.msra.mxu0 0.0
      %1196 = vmatprep.subr.mxu0 0.0
      %1197 = vmatpush1.msra.mxu0 0.0
      %1198 = vmatprep.subr.mxu0 0.0
      %1199 = vmatpush1.msra.mxu0 0.0
      %1200 = vmatprep.subr.mxu0 0.0
      %1201 = vmatpush1.msra.mxu0 0.0
      %1202 = vmatprep.subr.mxu0 0.0
      %1203 = vmatpush1.msra.mxu0 0.0
      %1204 = vmatprep.subr.mxu0 0.0
      %1205 = vmatpush1.msra.mxu0 0.0
      %1206 = vmatprep.subr.mxu0 0.0
      %1207 = vmatpush1.msra.mxu0 0.0
      %1208 = vmatprep.subr.mxu0 0.0
      %1209 = vmatpush1.msra.mxu0 0.0
      %1210 = vmatprep.subr.mxu0 0.0
      %1211 = vmatpush1.msra.mxu0 0.0
      %1212 = vmatprep.subr.mxu0 0.0
      %1213 = vmatpush1.msra.mxu0 0.0
      %1214 = vmatprep.mubr.f32.mxu0 0.0
      %1215 = vmatmul.mubr.f32.gmra.mrb[0].mxu0 %v1148
      %v1216 = vpop.f32.mrb[0].mxu0
      %v1217 = vadd.f32 0.0, %v1216
      %v1218 = vpop.f32.mrb[0].mxu0
      %1219 = vdwg.mxu0
      %v1220 = vsel %vm1147, %v1129, 0
      %1222 = vmatprep.subr.mxu0 0.0
      %1223 = vmatpush1.msra.mxu0 %v1130
      %1224 = vmatprep.subr.mxu0 0.0
      %1225 = vmatpush1.msra.mxu0 %v1131
      %1226 = vmatprep.subr.mxu0 0.0
      %1227 = vmatpush1.msra.mxu0 %v1132
      %1228 = vmatprep.subr.mxu0 0.0
      %1229 = vmatpush1.msra.mxu0 %v1133
      %1230 = vmatprep.subr.mxu0 0.0
      %1231 = vmatpush1.msra.mxu0 %v1134
      %1232 = vmatprep.subr.mxu0 0.0
      %1233 = vmatpush1.msra.mxu0 %v1135
      %1234 = vmatprep.subr.mxu0 0.0
      %1235 = vmatpush1.msra.mxu0 %v1136
      %1236 = vmatprep.subr.mxu0 0.0
      %1237 = vmatpush1.msra.mxu0 0.0
      %1238 = vmatprep.subr.mxu0 0.0
      %1239 = vmatpush1.msra.mxu0 0.0
      %1240 = vmatprep.subr.mxu0 0.0
      %1241 = vmatpush1.msra.mxu0 0.0
      %1242 = vmatprep.subr.mxu0 0.0
      %1243 = vmatpush1.msra.mxu0 0.0
      %1244 = vmatprep.subr.mxu0 0.0
      %1245 = vmatpush1.msra.mxu0 0.0
      %1246 = vmatprep.subr.mxu0 0.0
      %1247 = vmatpush1.msra.mxu0 0.0
      %1248 = vmatprep.subr.mxu0 0.0
      %1249 = vmatpush1.msra.mxu0 0.0
      %1250 = vmatprep.subr.mxu0 0.0
      %1251 = vmatpush1.msra.mxu0 0.0
      %1252 = vmatprep.subr.mxu0 0.0
      %1253 = vmatpush1.msra.mxu0 0.0
      %1254 = vmatprep.subr.mxu0 0.0
      %1255 = vmatpush1.msra.mxu0 0.0
      %1256 = vmatprep.subr.mxu0 0.0
      %1257 = vmatpush1.msra.mxu0 0.0
      %1258 = vmatprep.subr.mxu0 0.0
      %1259 = vmatpush1.msra.mxu0 0.0
      %1260 = vmatprep.subr.mxu0 0.0
      %1261 = vmatpush1.msra.mxu0 0.0
      %1262 = vmatprep.subr.mxu0 0.0
      %1263 = vmatpush1.msra.mxu0 0.0
      %1264 = vmatprep.subr.mxu0 0.0
      %1265 = vmatpush1.msra.mxu0 0.0
      %1266 = vmatprep.subr.mxu0 0.0
      %1267 = vmatpush1.msra.mxu0 0.0
      %1268 = vmatprep.subr.mxu0 0.0
      %1269 = vmatpush1.msra.mxu0 0.0
      %1270 = vmatprep.subr.mxu0 0.0
      %1271 = vmatpush1.msra.mxu0 0.0
      %1272 = vmatprep.subr.mxu0 0.0
      %1273 = vmatpush1.msra.mxu0 0.0
      %1274 = vmatprep.subr.mxu0 0.0
      %1275 = vmatpush1.msra.mxu0 0.0
      %1276 = vmatprep.subr.mxu0 0.0
      %1277 = vmatpush1.msra.mxu0 0.0
      %1278 = vmatprep.subr.mxu0 0.0
      %1279 = vmatpush1.msra.mxu0 0.0
      %1280 = vmatprep.subr.mxu0 0.0
      %1281 = vmatpush1.msra.mxu0 0.0
      %1282 = vmatprep.subr.mxu0 0.0
      %1283 = vmatpush1.msra.mxu0 0.0
      %1284 = vmatprep.subr.mxu0 0.0
      %1285 = vmatpush1.msra.mxu0 0.0
      %1286 = vmatprep.mubr.f32.mxu0 0.0
      %1287 = vmatmul.mubr.f32.gmra.mrb[0].mxu0 %v1220
      %v1288 = vpop.f32.mrb[0].mxu0
      %v1289 = vadd.f32 %v1217, %v1288
      %v1290 = vpop.f32.mrb[0].mxu0
      %1291 = vdwg.mxu0
      %s1292 = scalar_lea.vmem %s5, 112
      %v1293 = vld [vmem:[%s1292] sm:$0xff]
      %v1294 = vld [vmem:[%s1292 + $0x8] sm:$0xff]
      %v1295 = vld [vmem:[%s1292 + $0x10] sm:$0xff]
      %v1296 = vld [vmem:[%s1292 + $0x18] sm:$0xff]
      %v1297 = vld [vmem:[%s1292 + $0x20] sm:$0xff]
      %v1298 = vld [vmem:[%s1292 + $0x28] sm:$0xff]
      %v1299 = vld [vmem:[%s1292 + $0x30] sm:$0xff]
      %v1300 = vrot.slane %v1129, 2
      %v1301 = vsel %vm1147, %v1300, 0
      %1303 = vmatprep.subr.mxu0 0.0
      %1304 = vmatpush1.msra.mxu0 %v1293
      %1305 = vmatprep.subr.mxu0 0.0
      %1306 = vmatpush1.msra.mxu0 %v1294
      %1307 = vmatprep.subr.mxu0 0.0
      %1308 = vmatpush1.msra.mxu0 %v1295
      %1309 = vmatprep.subr.mxu0 0.0
      %1310 = vmatpush1.msra.mxu0 %v1296
      %1311 = vmatprep.subr.mxu0 0.0
      %1312 = vmatpush1.msra.mxu0 %v1297
      %1313 = vmatprep.subr.mxu0 0.0
      %1314 = vmatpush1.msra.mxu0 %v1298
      %1315 = vmatprep.subr.mxu0 0.0
      %1316 = vmatpush1.msra.mxu0 %v1299
      %1317 = vmatprep.subr.mxu0 0.0
      %1318 = vmatpush1.msra.mxu0 0.0
      %1319 = vmatprep.subr.mxu0 0.0
      %1320 = vmatpush1.msra.mxu0 0.0
      %1321 = vmatprep.subr.mxu0 0.0
      %1322 = vmatpush1.msra.mxu0 0.0
      %1323 = vmatprep.subr.mxu0 0.0
      %1324 = vmatpush1.msra.mxu0 0.0
      %1325 = vmatprep.subr.mxu0 0.0
      %1326 = vmatpush1.msra.mxu0 0.0
      %1327 = vmatprep.subr.mxu0 0.0
      %1328 = vmatpush1.msra.mxu0 0.0
      %1329 = vmatprep.subr.mxu0 0.0
      %1330 = vmatpush1.msra.mxu0 0.0
      %1331 = vmatprep.subr.mxu0 0.0
      %1332 = vmatpush1.msra.mxu0 0.0
      %1333 = vmatprep.subr.mxu0 0.0
      %1334 = vmatpush1.msra.mxu0 0.0
      %1335 = vmatprep.subr.mxu0 0.0
      %1336 = vmatpush1.msra.mxu0 0.0
      %1337 = vmatprep.subr.mxu0 0.0
      %1338 = vmatpush1.msra.mxu0 0.0
      %1339 = vmatprep.subr.mxu0 0.0
      %1340 = vmatpush1.msra.mxu0 0.0
      %1341 = vmatprep.subr.mxu0 0.0
      %1342 = vmatpush1.msra.mxu0 0.0
      %1343 = vmatprep.subr.mxu0 0.0
      %1344 = vmatpush1.msra.mxu0 0.0
      %1345 = vmatprep.subr.mxu0 0.0
      %1346 = vmatpush1.msra.mxu0 0.0
      %1347 = vmatprep.subr.mxu0 0.0
      %1348 = vmatpush1.msra.mxu0 0.0
      %1349 = vmatprep.subr.mxu0 0.0
      %1350 = vmatpush1.msra.mxu0 0.0
      %1351 = vmatprep.subr.mxu0 0.0
      %1352 = vmatpush1.msra.mxu0 0.0
      %1353 = vmatprep.subr.mxu0 0.0
      %1354 = vmatpush1.msra.mxu0 0.0
      %1355 = vmatprep.subr.mxu0 0.0
      %1356 = vmatpush1.msra.mxu0 0.0
      %1357 = vmatprep.subr.mxu0 0.0
      %1358 = vmatpush1.msra.mxu0 0.0
      %1359 = vmatprep.subr.mxu0 0.0
      %1360 = vmatpush1.msra.mxu0 0.0
      %1361 = vmatprep.subr.mxu0 0.0
      %1362 = vmatpush1.msra.mxu0 0.0
      %1363 = vmatprep.subr.mxu0 0.0
      %1364 = vmatpush1.msra.mxu0 0.0
      %1365 = vmatprep.subr.mxu0 0.0
      %1366 = vmatpush1.msra.mxu0 0.0
      %1367 = vmatprep.mubr.f32.mxu0 0.0
      %1368 = vmatmul.mubr.f32.gmra.mrb[0].mxu0 %v1301
      %v1369 = vpop.f32.mrb[0].mxu0
      %v1370 = vadd.f32 0.0, %v1369
      %v1371 = vpop.f32.mrb[0].mxu0
      %1372 = vdwg.mxu0
      %v1373 = vadd.f32 %v1289, %v1370
      %v1374 = vld [vmem:[%s6] sm:$0x1]
      %v1376 = vlaneseq
      %v1377 = vshrl.u32 %v1376, 7
      %v1378 = vsub.s32 0, %v1377
      %v1379 = vrot.slane %v1374, %v1378
      %v1381 = vadd.f32 %v1373, %v1379
      %v1382 = vmax.f32 %v1381, 0.0
      %v1383 = vld [vmem:[%s7] sm:$0x3]
      %vm1384 = vcmask 39936
      %v1386 = vsel %vm1384, %v1383, 0
      %vm1388 = vcmask 1044480
      %v1390 = vsel %vm1388, %v1382, 0
      %1392 = vmatprep.subr.mxu0 0.0
      %1393 = vmatpush1.msra.mxu0 %v1390
      %1394 = vmatprep.subr.mxu0 0.0
      %1395 = vmatpush1.msra.mxu0 0.0
      %1396 = vmatprep.subr.mxu0 0.0
      %1397 = vmatpush1.msra.mxu0 0.0
      %1398 = vmatprep.subr.mxu0 0.0
      %1399 = vmatpush1.msra.mxu0 0.0
      %1400 = vmatprep.subr.mxu0 0.0
      %1401 = vmatpush1.msra.mxu0 0.0
      %1402 = vmatprep.subr.mxu0 0.0
      %1403 = vmatpush1.msra.mxu0 0.0
      %1404 = vmatprep.subr.mxu0 0.0
      %1405 = vmatpush1.msra.mxu0 0.0
      %1406 = vmatprep.subr.mxu0 0.0
      %1407 = vmatpush1.msra.mxu0 0.0
      %1408 = vmatprep.subr.mxu0 0.0
      %1409 = vmatpush1.msra.mxu0 0.0
      %1410 = vmatprep.subr.mxu0 0.0
      %1411 = vmatpush1.msra.mxu0 0.0
      %1412 = vmatprep.subr.mxu0 0.0
      %1413 = vmatpush1.msra.mxu0 0.0
      %1414 = vmatprep.subr.mxu0 0.0
      %1415 = vmatpush1.msra.mxu0 0.0
      %1416 = vmatprep.subr.mxu0 0.0
      %1417 = vmatpush1.msra.mxu0 0.0
      %1418 = vmatprep.subr.mxu0 0.0
      %1419 = vmatpush1.msra.mxu0 0.0
      %1420 = vmatprep.subr.mxu0 0.0
      %1421 = vmatpush1.msra.mxu0 0.0
      %1422 = vmatprep.subr.mxu0 0.0
      %1423 = vmatpush1.msra.mxu0 0.0
      %1424 = vmatprep.subr.mxu0 0.0
      %1425 = vmatpush1.msra.mxu0 0.0
      %1426 = vmatprep.subr.mxu0 0.0
      %1427 = vmatpush1.msra.mxu0 0.0
      %1428 = vmatprep.subr.mxu0 0.0
      %1429 = vmatpush1.msra.mxu0 0.0
      %1430 = vmatprep.subr.mxu0 0.0
      %1431 = vmatpush1.msra.mxu0 0.0
      %1432 = vmatprep.subr.mxu0 0.0
      %1433 = vmatpush1.msra.mxu0 0.0
      %1434 = vmatprep.subr.mxu0 0.0
      %1435 = vmatpush1.msra.mxu0 0.0
      %1436 = vmatprep.subr.mxu0 0.0
      %1437 = vmatpush1.msra.mxu0 0.0
      %1438 = vmatprep.subr.mxu0 0.0
      %1439 = vmatpush1.msra.mxu0 0.0
      %1440 = vmatprep.subr.mxu0 0.0
      %1441 = vmatpush1.msra.mxu0 0.0
      %1442 = vmatprep.subr.mxu0 0.0
      %1443 = vmatpush1.msra.mxu0 0.0
      %1444 = vmatprep.subr.mxu0 0.0
      %1445 = vmatpush1.msra.mxu0 0.0
      %1446 = vmatprep.subr.mxu0 0.0
      %1447 = vmatpush1.msra.mxu0 0.0
      %1448 = vmatprep.subr.mxu0 0.0
      %1449 = vmatpush1.msra.mxu0 0.0
      %1450 = vmatprep.subr.mxu0 0.0
      %1451 = vmatpush1.msra.mxu0 0.0
      %1452 = vmatprep.subr.mxu0 0.0
      %1453 = vmatpush1.msra.mxu0 0.0
      %1454 = vmatprep.subr.mxu0 0.0
      %1455 = vmatpush1.msra.mxu0 0.0
      %1456 = vmatprep.mubr.f32.mxu0 0.0
      %1457 = vmatmul.mubr.f32.gmra.mrb[0].mxu0 %v1386
      %v1458 = vpop.f32.mrb[0].mxu0
      %v1459 = vadd.f32 0.0, %v1458
      %v1460 = vpop.f32.mrb[0].mxu0
      %1461 = vdwg.mxu0
      %s1462 = scalar_lea.vmem %s7, 2
      %v1463 = vld [vmem:[%s1462] sm:$0x3]
      %v1465 = vsel %vm1384, %v1463, 0
      %1467 = vmatprep.subr.mxu0 0.0
      %1468 = vmatpush1.msra.mxu0 %v1390
      %1469 = vmatprep.subr.mxu0 0.0
      %1470 = vmatpush1.msra.mxu0 0.0
      %1471 = vmatprep.subr.mxu0 0.0
      %1472 = vmatpush1.msra.mxu0 0.0
      %1473 = vmatprep.subr.mxu0 0.0
      %1474 = vmatpush1.msra.mxu0 0.0
      %1475 = vmatprep.subr.mxu0 0.0
      %1476 = vmatpush1.msra.mxu0 0.0
      %1477 = vmatprep.subr.mxu0 0.0
      %1478 = vmatpush1.msra.mxu0 0.0
      %1479 = vmatprep.subr.mxu0 0.0
      %1480 = vmatpush1.msra.mxu0 0.0
      %1481 = vmatprep.subr.mxu0 0.0
      %1482 = vmatpush1.msra.mxu0 0.0
      %1483 = vmatprep.subr.mxu0 0.0
      %1484 = vmatpush1.msra.mxu0 0.0
      %1485 = vmatprep.subr.mxu0 0.0
      %1486 = vmatpush1.msra.mxu0 0.0
      %1487 = vmatprep.subr.mxu0 0.0
      %1488 = vmatpush1.msra.mxu0 0.0
      %1489 = vmatprep.subr.mxu0 0.0
      %1490 = vmatpush1.msra.mxu0 0.0
      %1491 = vmatprep.subr.mxu0 0.0
      %1492 = vmatpush1.msra.mxu0 0.0
      %1493 = vmatprep.subr.mxu0 0.0
      %1494 = vmatpush1.msra.mxu0 0.0
      %1495 = vmatprep.subr.mxu0 0.0
      %1496 = vmatpush1.msra.mxu0 0.0
      %1497 = vmatprep.subr.mxu0 0.0
      %1498 = vmatpush1.msra.mxu0 0.0
      %1499 = vmatprep.subr.mxu0 0.0
      %1500 = vmatpush1.msra.mxu0 0.0
      %1501 = vmatprep.subr.mxu0 0.0
      %1502 = vmatpush1.msra.mxu0 0.0
      %1503 = vmatprep.subr.mxu0 0.0
      %1504 = vmatpush1.msra.mxu0 0.0
      %1505 = vmatprep.subr.mxu0 0.0
      %1506 = vmatpush1.msra.mxu0 0.0
      %1507 = vmatprep.subr.mxu0 0.0
      %1508 = vmatpush1.msra.mxu0 0.0
      %1509 = vmatprep.subr.mxu0 0.0
      %1510 = vmatpush1.msra.mxu0 0.0
      %1511 = vmatprep.subr.mxu0 0.0
      %1512 = vmatpush1.msra.mxu0 0.0
      %1513 = vmatprep.subr.mxu0 0.0
      %1514 = vmatpush1.msra.mxu0 0.0
      %1515 = vmatprep.subr.mxu0 0.0
      %1516 = vmatpush1.msra.mxu0 0.0
      %1517 = vmatprep.subr.mxu0 0.0
      %1518 = vmatpush1.msra.mxu0 0.0
      %1519 = vmatprep.subr.mxu0 0.0
      %1520 = vmatpush1.msra.mxu0 0.0
      %1521 = vmatprep.subr.mxu0 0.0
      %1522 = vmatpush1.msra.mxu0 0.0
      %1523 = vmatprep.subr.mxu0 0.0
      %1524 = vmatpush1.msra.mxu0 0.0
      %1525 = vmatprep.subr.mxu0 0.0
      %1526 = vmatpush1.msra.mxu0 0.0
      %1527 = vmatprep.subr.mxu0 0.0
      %1528 = vmatpush1.msra.mxu0 0.0
      %1529 = vmatprep.subr.mxu0 0.0
      %1530 = vmatpush1.msra.mxu0 0.0
      %1531 = vmatprep.mubr.f32.mxu0 0.0
      %1532 = vmatmul.mubr.f32.gmra.mrb[0].mxu0 %v1465
      %v1533 = vpop.f32.mrb[0].mxu0
      %v1534 = vadd.f32 0.0, %v1533
      %v1535 = vpop.f32.mrb[0].mxu0
      %1536 = vdwg.mxu0
      %v1537 = vmax.f32 %v1459, %v1534
      %v1538 = vld [vmem:[%s8] sm:$0xff]
      %v1539 = vld [vmem:[%s8 + $0x8] sm:$0xff]
      %v1540 = vld [vmem:[%s8 + $0x10] sm:$0xff]
      %v1541 = vld [vmem:[%s8 + $0x18] sm:$0xff]
      %v1542 = vld [vmem:[%s8 + $0x20] sm:$0xff]
      %v1543 = vld [vmem:[%s8 + $0x28] sm:$0xff]
      %v1544 = vld [vmem:[%s8 + $0x30] sm:$0xff]
      %v1545 = vld [vmem:[%s8 + $0x38] sm:$0xff]
      %v1546 = vld [vmem:[%s8 + $0x40] sm:$0xff]
      %v1547 = vld [vmem:[%s8 + $0x48] sm:$0xff]
      %vm1548 = vcmask 654336
      %v1550 = vsel %vm1548, %v1537, 0
      %1552 = vmatprep.subr.mxu0 0.0
      %1553 = vmatpush1.msra.mxu0 %v1538
      %1554 = vmatprep.subr.mxu0 0.0
      %1555 = vmatpush1.msra.mxu0 %v1539
      %1556 = vmatprep.subr.mxu0 0.0
      %1557 = vmatpush1.msra.mxu0 %v1540
      %1558 = vmatprep.subr.mxu0 0.0
      %1559 = vmatpush1.msra.mxu0 %v1541
      %1560 = vmatprep.subr.mxu0 0.0
      %1561 = vmatpush1.msra.mxu0 %v1542
      %1562 = vmatprep.subr.mxu0 0.0
      %1563 = vmatpush1.msra.mxu0 %v1543
      %1564 = vmatprep.subr.mxu0 0.0
      %1565 = vmatpush1.msra.mxu0 %v1544
      %1566 = vmatprep.subr.mxu0 0.0
      %1567 = vmatpush1.msra.mxu0 %v1545
      %1568 = vmatprep.subr.mxu0 0.0
      %1569 = vmatpush1.msra.mxu0 %v1546
      %1570 = vmatprep.subr.mxu0 0.0
      %1571 = vmatpush1.msra.mxu0 %v1547
      %1572 = vmatprep.subr.mxu0 0.0
      %1573 = vmatpush1.msra.mxu0 0.0
      %1574 = vmatprep.subr.mxu0 0.0
      %1575 = vmatpush1.msra.mxu0 0.0
      %1576 = vmatprep.subr.mxu0 0.0
      %1577 = vmatpush1.msra.mxu0 0.0
      %1578 = vmatprep.subr.mxu0 0.0
      %1579 = vmatpush1.msra.mxu0 0.0
      %1580 = vmatprep.subr.mxu0 0.0
      %1581 = vmatpush1.msra.mxu0 0.0
      %1582 = vmatprep.subr.mxu0 0.0
      %1583 = vmatpush1.msra.mxu0 0.0
      %1584 = vmatprep.subr.mxu0 0.0
      %1585 = vmatpush1.msra.mxu0 0.0
      %1586 = vmatprep.subr.mxu0 0.0
      %1587 = vmatpush1.msra.mxu0 0.0
      %1588 = vmatprep.subr.mxu0 0.0
      %1589 = vmatpush1.msra.mxu0 0.0
      %1590 = vmatprep.subr.mxu0 0.0
      %1591 = vmatpush1.msra.mxu0 0.0
      %1592 = vmatprep.subr.mxu0 0.0
      %1593 = vmatpush1.msra.mxu0 0.0
      %1594 = vmatprep.subr.mxu0 0.0
      %1595 = vmatpush1.msra.mxu0 0.0
      %1596 = vmatprep.subr.mxu0 0.0
      %1597 = vmatpush1.msra.mxu0 0.0
      %1598 = vmatprep.subr.mxu0 0.0
      %1599 = vmatpush1.msra.mxu0 0.0
      %1600 = vmatprep.subr.mxu0 0.0
      %1601 = vmatpush1.msra.mxu0 0.0
      %1602 = vmatprep.subr.mxu0 0.0
      %1603 = vmatpush1.msra.mxu0 0.0
      %1604 = vmatprep.subr.mxu0 0.0
      %1605 = vmatpush1.msra.mxu0 0.0
      %1606 = vmatprep.subr.mxu0 0.0
      %1607 = vmatpush1.msra.mxu0 0.0
      %1608 = vmatprep.subr.mxu0 0.0
      %1609 = vmatpush1.msra.mxu0 0.0
      %1610 = vmatprep.subr.mxu0 0.0
      %1611 = vmatpush1.msra.mxu0 0.0
      %1612 = vmatprep.subr.mxu0 0.0
      %1613 = vmatpush1.msra.mxu0 0.0
      %1614 = vmatprep.subr.mxu0 0.0
      %1615 = vmatpush1.msra.mxu0 0.0
      %1616 = vmatprep.mubr.f32.mxu0 0.0
      %1617 = vmatmul.mubr.f32.gmra.mrb[0].mxu0 %v1550
      %v1618 = vpop.f32.mrb[0].mxu0
      %v1619 = vadd.f32 0.0, %v1618
      %v1620 = vpop.f32.mrb[0].mxu0
      %1621 = vdwg.mxu0
      %s1622 = scalar_lea.vmem %s8, 80
      %v1623 = vld [vmem:[%s1622] sm:$0xff]
      %v1624 = vld [vmem:[%s1622 + $0x8] sm:$0xff]
      %v1625 = vld [vmem:[%s1622 + $0x10] sm:$0xff]
      %v1626 = vld [vmem:[%s1622 + $0x18] sm:$0xff]
      %v1627 = vld [vmem:[%s1622 + $0x20] sm:$0xff]
      %v1628 = vld [vmem:[%s1622 + $0x28] sm:$0xff]
      %v1629 = vld [vmem:[%s1622 + $0x30] sm:$0xff]
      %v1630 = vld [vmem:[%s1622 + $0x38] sm:$0xff]
      %v1631 = vld [vmem:[%s1622 + $0x40] sm:$0xff]
      %v1632 = vld [vmem:[%s1622 + $0x48] sm:$0xff]
      %1633 = vmatprep.subr.mxu0 0.0
      %1634 = vmatpush1.msra.mxu0 %v1623
      %1635 = vmatprep.subr.mxu0 0.0
      %1636 = vmatpush1.msra.mxu0 %v1624
      %1637 = vmatprep.subr.mxu0 0.0
      %1638 = vmatpush1.msra.mxu0 %v1625
      %1639 = vmatprep.subr.mxu0 0.0
      %1640 = vmatpush1.msra.mxu0 %v1626
      %1641 = vmatprep.subr.mxu0 0.0
      %1642 = vmatpush1.msra.mxu0 %v1627
      %1643 = vmatprep.subr.mxu0 0.0
      %1644 = vmatpush1.msra.mxu0 %v1628
      %1645 = vmatprep.subr.mxu0 0.0
      %1646 = vmatpush1.msra.mxu0 %v1629
      %1647 = vmatprep.subr.mxu0 0.0
      %1648 = vmatpush1.msra.mxu0 %v1630
      %1649 = vmatprep.subr.mxu0 0.0
      %1650 = vmatpush1.msra.mxu0 %v1631
      %1651 = vmatprep.subr.mxu0 0.0
      %1652 = vmatpush1.msra.mxu0 %v1632
      %1653 = vmatprep.subr.mxu0 0.0
      %1654 = vmatpush1.msra.mxu0 0.0
      %1655 = vmatprep.subr.mxu0 0.0
      %1656 = vmatpush1.msra.mxu0 0.0
      %1657 = vmatprep.subr.mxu0 0.0
      %1658 = vmatpush1.msra.mxu0 0.0
      %1659 = vmatprep.subr.mxu0 0.0
      %1660 = vmatpush1.msra.mxu0 0.0
      %1661 = vmatprep.subr.mxu0 0.0
      %1662 = vmatpush1.msra.mxu0 0.0
      %1663 = vmatprep.subr.mxu0 0.0
      %1664 = vmatpush1.msra.mxu0 0.0
      %1665 = vmatprep.subr.mxu0 0.0
      %1666 = vmatpush1.msra.mxu0 0.0
      %1667 = vmatprep.subr.mxu0 0.0
      %1668 = vmatpush1.msra.mxu0 0.0
      %1669 = vmatprep.subr.mxu0 0.0
      %1670 = vmatpush1.msra.mxu0 0.0
      %1671 = vmatprep.subr.mxu0 0.0
      %1672 = vmatpush1.msra.mxu0 0.0
      %1673 = vmatprep.subr.mxu0 0.0
      %1674 = vmatpush1.msra.mxu0 0.0
      %1675 = vmatprep.subr.mxu0 0.0
      %1676 = vmatpush1.msra.mxu0 0.0
      %1677 = vmatprep.subr.mxu0 0.0
      %1678 = vmatpush1.msra.mxu0 0.0
      %1679 = vmatprep.subr.mxu0 0.0
      %1680 = vmatpush1.msra.mxu0 0.0
      %1681 = vmatprep.subr.mxu0 0.0
      %1682 = vmatpush1.msra.mxu0 0.0
      %1683 = vmatprep.subr.mxu0 0.0
      %1684 = vmatpush1.msra.mxu0 0.0
      %1685 = vmatprep.subr.mxu0 0.0
      %1686 = vmatpush1.msra.mxu0 0.0
      %1687 = vmatprep.subr.mxu0 0.0
      %1688 = vmatpush1.msra.mxu0 0.0
      %1689 = vmatprep.subr.mxu0 0.0
      %1690 = vmatpush1.msra.mxu0 0.0
      %1691 = vmatprep.subr.mxu0 0.0
      %1692 = vmatpush1.msra.mxu0 0.0
      %1693 = vmatprep.subr.mxu0 0.0
      %1694 = vmatpush1.msra.mxu0 0.0
      %1695 = vmatprep.subr.mxu0 0.0
      %1696 = vmatpush1.msra.mxu0 0.0
      %1697 = vmatprep.mubr.f32.mxu0 0.0
      %1698 = vmatmul.mubr.f32.gmra.mrb[0].mxu0 %v1550
      %v1699 = vpop.f32.mrb[0].mxu0
      %v1700 = vadd.f32 0.0, %v1699
      %v1701 = vpop.f32.mrb[0].mxu0
      %1702 = vdwg.mxu0
      %v1703 = vmax.f32 %v1619, %v1700
      %vm1704 = vcmask 254976
      %1705 = vst.msk [vmem:[%s530] sm:$0x3] %vm1704, %v1703
      %v1706 = vld [vmem:[%s9] sm:$0xff]
      %v1707 = vld [vmem:[%s9 + $0x8] sm:$0xff]
      %v1708 = vld [vmem:[%s9 + $0x10] sm:$0xff]
      %v1709 = vld [vmem:[%s9 + $0x18] sm:$0xff]
      %s1710 = scalar_lea.vmem %s9, 32
      %v1711 = vld [vmem:[%s1710] sm:$0xff]
      %v1712 = vld [vmem:[%s1710 + $0x8] sm:$0xff]
      %v1713 = vld [vmem:[%s1710 + $0x10] sm:$0xff]
      %v1714 = vld [vmem:[%s1710 + $0x18] sm:$0xff]
      %v1716 = vrot.slane %v1703, 1
      %vm1717 = vcmask 261120
      %v1718 = vsel %vm1717, %v1716, 0
      %1720 = vmatprep.subr.mxu0 0.0
      %1721 = vmatpush1.msra.mxu0 %v1711
      %1722 = vmatprep.subr.mxu0 0.0
      %1723 = vmatpush1.msra.mxu0 %v1712
      %1724 = vmatprep.subr.mxu0 0.0
      %1725 = vmatpush1.msra.mxu0 %v1713
      %1726 = vmatprep.subr.mxu0 0.0
      %1727 = vmatpush1.msra.mxu0 %v1714
      %1728 = vmatprep.subr.mxu0 0.0
      %1729 = vmatpush1.msra.mxu0 0.0
      %1730 = vmatprep.subr.mxu0 0.0
      %1731 = vmatpush1.msra.mxu0 0.0
      %1732 = vmatprep.subr.mxu0 0.0
      %1733 = vmatpush1.msra.mxu0 0.0
      %1734 = vmatprep.subr.mxu0 0.0
      %1735 = vmatpush1.msra.mxu0 0.0
      %1736 = vmatprep.subr.mxu0 0.0
      %1737 = vmatpush1.msra.mxu0 0.0
      %1738 = vmatprep.subr.mxu0 0.0
      %1739 = vmatpush1.msra.mxu0 0.0
      %1740 = vmatprep.subr.mxu0 0.0
      %1741 = vmatpush1.msra.mxu0 0.0
      %1742 = vmatprep.subr.mxu0 0.0
      %1743 = vmatpush1.msra.mxu0 0.0
      %1744 = vmatprep.subr.mxu0 0.0
      %1745 = vmatpush1.msra.mxu0 0.0
      %1746 = vmatprep.subr.mxu0 0.0
      %1747 = vmatpush1.msra.mxu0 0.0
      %1748 = vmatprep.subr.mxu0 0.0
      %1749 = vmatpush1.msra.mxu0 0.0
      %1750 = vmatprep.subr.mxu0 0.0
      %1751 = vmatpush1.msra.mxu0 0.0
      %1752 = vmatprep.subr.mxu0 0.0
      %1753 = vmatpush1.msra.mxu0 0.0
      %1754 = vmatprep.subr.mxu0 0.0
      %1755 = vmatpush1.msra.mxu0 0.0
      %1756 = vmatprep.subr.mxu0 0.0
      %1757 = vmatpush1.msra.mxu0 0.0
      %1758 = vmatprep.subr.mxu0 0.0
      %1759 = vmatpush1.msra.mxu0 0.0
      %1760 = vmatprep.subr.mxu0 0.0
      %1761 = vmatpush1.msra.mxu0 0.0
      %1762 = vmatprep.subr.mxu0 0.0
      %1763 = vmatpush1.msra.mxu0 0.0
      %1764 = vmatprep.subr.mxu0 0.0
      %1765 = vmatpush1.msra.mxu0 0.0
      %1766 = vmatprep.subr.mxu0 0.0
      %1767 = vmatpush1.msra.mxu0 0.0
      %1768 = vmatprep.subr.mxu0 0.0
      %1769 = vmatpush1.msra.mxu0 0.0
      %1770 = vmatprep.subr.mxu0 0.0
      %1771 = vmatpush1.msra.mxu0 0.0
      %1772 = vmatprep.subr.mxu0 0.0
      %1773 = vmatpush1.msra.mxu0 0.0
      %1774 = vmatprep.subr.mxu0 0.0
      %1775 = vmatpush1.msra.mxu0 0.0
      %1776 = vmatprep.subr.mxu0 0.0
      %1777 = vmatpush1.msra.mxu0 0.0
      %1778 = vmatprep.subr.mxu0 0.0
      %1779 = vmatpush1.msra.mxu0 0.0
      %1780 = vmatprep.subr.mxu0 0.0
      %1781 = vmatpush1.msra.mxu0 0.0
      %1782 = vmatprep.subr.mxu0 0.0
      %1783 = vmatpush1.msra.mxu0 0.0
      %1784 = vmatprep.mubr.f32.mxu0 0.0
      %1785 = vmatmul.mubr.f32.gmra.mrb[0].mxu0 %v1718
      %v1786 = vpop.f32.mrb[0].mxu0
      %v1787 = vadd.f32 0.0, %v1786
      %v1788 = vpop.f32.mrb[0].mxu0
      %1789 = vdwg.mxu0
      %v1790 = vsel %vm1717, %v1703, 0
      %1792 = vmatprep.subr.mxu0 0.0
      %1793 = vmatpush1.msra.mxu0 %v1706
      %1794 = vmatprep.subr.mxu0 0.0
      %1795 = vmatpush1.msra.mxu0 %v1707
      %1796 = vmatprep.subr.mxu0 0.0
      %1797 = vmatpush1.msra.mxu0 %v1708
      %1798 = vmatprep.subr.mxu0 0.0
      %1799 = vmatpush1.msra.mxu0 %v1709
      %1800 = vmatprep.subr.mxu0 0.0
      %1801 = vmatpush1.msra.mxu0 0.0
      %1802 = vmatprep.subr.mxu0 0.0
      %1803 = vmatpush1.msra.mxu0 0.0
      %1804 = vmatprep.subr.mxu0 0.0
      %1805 = vmatpush1.msra.mxu0 0.0
      %1806 = vmatprep.subr.mxu0 0.0
      %1807 = vmatpush1.msra.mxu0 0.0
      %1808 = vmatprep.subr.mxu0 0.0
      %1809 = vmatpush1.msra.mxu0 0.0
      %1810 = vmatprep.subr.mxu0 0.0
      %1811 = vmatpush1.msra.mxu0 0.0
      %1812 = vmatprep.subr.mxu0 0.0
      %1813 = vmatpush1.msra.mxu0 0.0
      %1814 = vmatprep.subr.mxu0 0.0
      %1815 = vmatpush1.msra.mxu0 0.0
      %1816 = vmatprep.subr.mxu0 0.0
      %1817 = vmatpush1.msra.mxu0 0.0
      %1818 = vmatprep.subr.mxu0 0.0
      %1819 = vmatpush1.msra.mxu0 0.0
      %1820 = vmatprep.subr.mxu0 0.0
      %1821 = vmatpush1.msra.mxu0 0.0
      %1822 = vmatprep.subr.mxu0 0.0
      %1823 = vmatpush1.msra.mxu0 0.0
      %1824 = vmatprep.subr.mxu0 0.0
      %1825 = vmatpush1.msra.mxu0 0.0
      %1826 = vmatprep.subr.mxu0 0.0
      %1827 = vmatpush1.msra.mxu0 0.0
      %1828 = vmatprep.subr.mxu0 0.0
      %1829 = vmatpush1.msra.mxu0 0.0
      %1830 = vmatprep.subr.mxu0 0.0
      %1831 = vmatpush1.msra.mxu0 0.0
      %1832 = vmatprep.subr.mxu0 0.0
      %1833 = vmatpush1.msra.mxu0 0.0
      %1834 = vmatprep.subr.mxu0 0.0
      %1835 = vmatpush1.msra.mxu0 0.0
      %1836 = vmatprep.subr.mxu0 0.0
      %1837 = vmatpush1.msra.mxu0 0.0
      %1838 = vmatprep.subr.mxu0 0.0
      %1839 = vmatpush1.msra.mxu0 0.0
      %1840 = vmatprep.subr.mxu0 0.0
      %1841 = vmatpush1.msra.mxu0 0.0
      %1842 = vmatprep.subr.mxu0 0.0
      %1843 = vmatpush1.msra.mxu0 0.0
      %1844 = vmatprep.subr.mxu0 0.0
      %1845 = vmatpush1.msra.mxu0 0.0
      %1846 = vmatprep.subr.mxu0 0.0
      %1847 = vmatpush1.msra.mxu0 0.0
      %1848 = vmatprep.subr.mxu0 0.0
      %1849 = vmatpush1.msra.mxu0 0.0
      %1850 = vmatprep.subr.mxu0 0.0
      %1851 = vmatpush1.msra.mxu0 0.0
      %1852 = vmatprep.subr.mxu0 0.0
      %1853 = vmatpush1.msra.mxu0 0.0
      %1854 = vmatprep.subr.mxu0 0.0
      %1855 = vmatpush1.msra.mxu0 0.0
      %1856 = vmatprep.mubr.f32.mxu0 0.0
      %1857 = vmatmul.mubr.f32.gmra.mrb[0].mxu0 %v1790
      %v1858 = vpop.f32.mrb[0].mxu0
      %v1859 = vadd.f32 %v1787, %v1858
      %v1860 = vpop.f32.mrb[0].mxu0
      %1861 = vdwg.mxu0
      %v1862 = vld [vmem:[%s10] sm:$0x1]
      %v1863 = vadd.f32 %v1859, %v1862
      %v1864 = vmax.f32 %v1863, 0.0
      %v1865 = vld [vmem:[%s11] sm:$0xff]
      %v1866 = vld [vmem:[%s11 + $0x8] sm:$0xff]
      %v1867 = vld [vmem:[%s11 + $0x10] sm:$0xff]
      %v1868 = vld [vmem:[%s11 + $0x18] sm:$0xff]
      %v1869 = vld [vmem:[%s12] sm:$0x1]
      %v1871 = vsel %vm1717, %v1864, 0
      %1873 = vmatprep.subr.mxu0 0.0
      %1874 = vmatpush1.msra.mxu0 %v1865
      %1875 = vmatprep.subr.mxu0 0.0
      %1876 = vmatpush1.msra.mxu0 %v1866
      %1877 = vmatprep.subr.mxu0 0.0
      %1878 = vmatpush1.msra.mxu0 %v1867
      %1879 = vmatprep.subr.mxu0 0.0
      %1880 = vmatpush1.msra.mxu0 %v1868
      %1881 = vmatprep.subr.mxu0 0.0
      %1882 = vmatpush1.msra.mxu0 0.0
      %1883 = vmatprep.subr.mxu0 0.0
      %1884 = vmatpush1.msra.mxu0 0.0
      %1885 = vmatprep.subr.mxu0 0.0
      %1886 = vmatpush1.msra.mxu0 0.0
      %1887 = vmatprep.subr.mxu0 0.0
      %1888 = vmatpush1.msra.mxu0 0.0
      %1889 = vmatprep.subr.mxu0 0.0
      %1890 = vmatpush1.msra.mxu0 0.0
      %1891 = vmatprep.subr.mxu0 0.0
      %1892 = vmatpush1.msra.mxu0 0.0
      %1893 = vmatprep.subr.mxu0 0.0
      %1894 = vmatpush1.msra.mxu0 0.0
      %1895 = vmatprep.subr.mxu0 0.0
      %1896 = vmatpush1.msra.mxu0 0.0
      %1897 = vmatprep.subr.mxu0 0.0
      %1898 = vmatpush1.msra.mxu0 0.0
      %1899 = vmatprep.subr.mxu0 0.0
      %1900 = vmatpush1.msra.mxu0 0.0
      %1901 = vmatprep.subr.mxu0 0.0
      %1902 = vmatpush1.msra.mxu0 0.0
      %1903 = vmatprep.subr.mxu0 0.0
      %1904 = vmatpush1.msra.mxu0 0.0
      %1905 = vmatprep.subr.mxu0 0.0
      %1906 = vmatpush1.msra.mxu0 0.0
      %1907 = vmatprep.subr.mxu0 0.0
      %1908 = vmatpush1.msra.mxu0 0.0
      %1909 = vmatprep.subr.mxu0 0.0
      %1910 = vmatpush1.msra.mxu0 0.0
      %1911 = vmatprep.subr.mxu0 0.0
      %1912 = vmatpush1.msra.mxu0 0.0
      %1913 = vmatprep.subr.mxu0 0.0
      %1914 = vmatpush1.msra.mxu0 0.0
      %1915 = vmatprep.subr.mxu0 0.0
      %1916 = vmatpush1.msra.mxu0 0.0
      %1917 = vmatprep.subr.mxu0 0.0
      %1918 = vmatpush1.msra.mxu0 0.0
      %1919 = vmatprep.subr.mxu0 0.0
      %1920 = vmatpush1.msra.mxu0 0.0
      %1921 = vmatprep.subr.mxu0 0.0
      %1922 = vmatpush1.msra.mxu0 0.0
      %1923 = vmatprep.subr.mxu0 0.0
      %1924 = vmatpush1.msra.mxu0 0.0
      %1925 = vmatprep.subr.mxu0 0.0
      %1926 = vmatpush1.msra.mxu0 0.0
      %1927 = vmatprep.subr.mxu0 0.0
      %1928 = vmatpush1.msra.mxu0 0.0
      %1929 = vmatprep.subr.mxu0 0.0
      %1930 = vmatpush1.msra.mxu0 0.0
      %1931 = vmatprep.subr.mxu0 0.0
      %1932 = vmatpush1.msra.mxu0 0.0
      %1933 = vmatprep.subr.mxu0 0.0
      %1934 = vmatpush1.msra.mxu0 0.0
      %1935 = vmatprep.subr.mxu0 0.0
      %1936 = vmatpush1.msra.mxu0 0.0
      %1937 = vmatprep.mubr.f32.mxu0 0.0
      %1938 = vmatmul.mubr.f32.gmra.mrb[0].mxu0 %v1871
      %v1939 = vpop.f32.mrb[0].mxu0
      %v1940 = vadd.f32 %v1869, %v1939
      %v1941 = vpop.f32.mrb[0].mxu0
      %1942 = vdwg.mxu0
      %v1943 = vmax.f32 %v1940, 0.0
      %v1944 = vld [vmem:[%s13] sm:$0xff]
      %v1945 = vld [vmem:[%s13 + $0x8] sm:$0xff]
      %v1946 = vld [vmem:[#allocation2] sm:$0x1]
      %v1948 = vsel %vm544, %v1943, 0
      %1950 = vmatprep.subr.mxu0 0.0
      %1951 = vmatpush1.msra.mxu0 %v1944
      %1952 = vmatprep.subr.mxu0 0.0
      %1953 = vmatpush1.msra.mxu0 %v1945
      %1954 = vmatprep.subr.mxu0 0.0
      %1955 = vmatpush1.msra.mxu0 0.0
      %1956 = vmatprep.subr.mxu0 0.0
      %1957 = vmatpush1.msra.mxu0 0.0
      %1958 = vmatprep.subr.mxu0 0.0
      %1959 = vmatpush1.msra.mxu0 0.0
      %1960 = vmatprep.subr.mxu0 0.0
      %1961 = vmatpush1.msra.mxu0 0.0
      %1962 = vmatprep.subr.mxu0 0.0
      %1963 = vmatpush1.msra.mxu0 0.0
      %1964 = vmatprep.subr.mxu0 0.0
      %1965 = vmatpush1.msra.mxu0 0.0
      %1966 = vmatprep.subr.mxu0 0.0
      %1967 = vmatpush1.msra.mxu0 0.0
      %1968 = vmatprep.subr.mxu0 0.0
      %1969 = vmatpush1.msra.mxu0 0.0
      %1970 = vmatprep.subr.mxu0 0.0
      %1971 = vmatpush1.msra.mxu0 0.0
      %1972 = vmatprep.subr.mxu0 0.0
      %1973 = vmatpush1.msra.mxu0 0.0
      %1974 = vmatprep.subr.mxu0 0.0
      %1975 = vmatpush1.msra.mxu0 0.0
      %1976 = vmatprep.subr.mxu0 0.0
      %1977 = vmatpush1.msra.mxu0 0.0
      %1978 = vmatprep.subr.mxu0 0.0
      %1979 = vmatpush1.msra.mxu0 0.0
      %1980 = vmatprep.subr.mxu0 0.0
      %1981 = vmatpush1.msra.mxu0 0.0
      %1982 = vmatprep.subr.mxu0 0.0
      %1983 = vmatpush1.msra.mxu0 0.0
      %1984 = vmatprep.subr.mxu0 0.0
      %1985 = vmatpush1.msra.mxu0 0.0
      %1986 = vmatprep.subr.mxu0 0.0
      %1987 = vmatpush1.msra.mxu0 0.0
      %1988 = vmatprep.subr.mxu0 0.0
      %1989 = vmatpush1.msra.mxu0 0.0
      %1990 = vmatprep.subr.mxu0 0.0
      %1991 = vmatpush1.msra.mxu0 0.0
      %1992 = vmatprep.subr.mxu0 0.0
      %1993 = vmatpush1.msra.mxu0 0.0
      %1994 = vmatprep.subr.mxu0 0.0
      %1995 = vmatpush1.msra.mxu0 0.0
      %1996 = vmatprep.subr.mxu0 0.0
      %1997 = vmatpush1.msra.mxu0 0.0
      %1998 = vmatprep.subr.mxu0 0.0
      %1999 = vmatpush1.msra.mxu0 0.0
      %2000 = vmatprep.subr.mxu0 0.0
      %2001 = vmatpush1.msra.mxu0 0.0
      %2002 = vmatprep.subr.mxu0 0.0
      %2003 = vmatpush1.msra.mxu0 0.0
      %2004 = vmatprep.subr.mxu0 0.0
      %2005 = vmatpush1.msra.mxu0 0.0
      %2006 = vmatprep.subr.mxu0 0.0
      %2007 = vmatpush1.msra.mxu0 0.0
      %2008 = vmatprep.subr.mxu0 0.0
      %2009 = vmatpush1.msra.mxu0 0.0
      %2010 = vmatprep.subr.mxu0 0.0
      %2011 = vmatpush1.msra.mxu0 0.0
      %2012 = vmatprep.subr.mxu0 0.0
      %2013 = vmatpush1.msra.mxu0 0.0
      %2014 = vmatprep.mubr.f32.mxu0 0.0
      %2015 = vmatmul.mubr.f32.gmra.mrb[0].mxu0 %v1948
      %v2016 = vpop.f32.mrb[0].mxu0
      %v2017 = vadd.f32 %v1946, %v2016
      %v2018 = vpop.f32.mrb[0].mxu0
      %2019 = vdwg.mxu0
      %vm2020 = vcmask 0
      %2021 = vst.msk [vmem:[%s526] sm:$0x1] %vm2020, %v2017
      %p2022 = scmp.lt.s32.totalorder %s30, 1
      %s2023 = scalar_select %p2022, %s30, 1
      %s2024 = scalar_lea.vmem %s15, %s2023
      %p2025 = scmp.lt.s32.totalorder %s30, 1
      %s2026 = scalar_select %p2025, %s30, 1
      %s2027 = smul.addr %s2026, 2
      %s2028 = scalar_lea.vmem %s16, %s2027
      // Predicated region
      $region81: #{net_forward.1} parent=79 // pred_check
        %p2029 = pneg %p368
      $region82: #{net_forward.1} parent=79 // pred_check_branch
        %2031 = sbr.rel (%p2029) target = $region84
      $region83: #{net_forward.1} parent=79 // pred_region
        _
      $region84: #{net_forward.1} parent=79 // pred_fallthru
        _
      // Predicated region
      $region85: #{net_forward.1} parent=79 // pred_check
        %p2032 = pneg %p394
      $region86: #{net_forward.1} parent=79 // pred_check_branch
        %2034 = sbr.rel (%p2032) target = $region88
      $region87: #{net_forward.1} parent=79 // pred_region
        _
      $region88: #{net_forward.1} parent=79 // pred_fallthru
        _
    $region80: #{net_forward.1} parent=5 // pred_fallthru
      _
    %p2035 = scmp.le.s32.totalorder 2, %s25
    // Predicated region
    $region89: #{net_forward.1} parent=5 // pred_check
      %p2036 = pneg %p2035
    $region90: #{net_forward.1} parent=5 // pred_check_branch
      %2038 = sbr.rel (%p2036) target = $region92
    $region91: #{net_forward.1} parent=5 // pred_region
      %s2039 = ssub.s32 %s25, 2
      // Predicated region
      $region93: #{net_forward.1} parent=91 // pred_check
        %p2040 = pneg %p374
      $region94: #{net_forward.1} parent=91 // pred_check_branch
        %2042 = sbr.rel (%p2040) target = $region96
      $region95: #{net_forward.1} parent=91 // pred_region
        %p2043 = scmp.lt.s32.totalorder %s31, 1
        %s2044 = scalar_select %p2043, %s31, 1
        %s2045 = scalar_lea.vmem %s15, %s2044
      $region96: #{net_forward.1} parent=91 // pred_fallthru
        _
      // Predicated region
      $region97: #{net_forward.1} parent=91 // pred_check
        %p2046 = pneg %p400
      $region98: #{net_forward.1} parent=91 // pred_check_branch
        %2048 = sbr.rel (%p2046) target = $region100
      $region99: #{net_forward.1} parent=91 // pred_region
        %p2049 = scmp.lt.s32.totalorder %s31, 1
        %s2050 = scalar_select %p2049, %s31, 1
        %s2051 = smul.addr %s2050, 2
        %s2052 = scalar_lea.vmem %s16, %s2051
      $region100: #{net_forward.1} parent=91 // pred_fallthru
        _
    $region92: #{net_forward.1} parent=5 // pred_fallthru
      _
  $region6: #{net_forward.1} parent=0 // loop_footer
    %s29 = sadd.s32 1, %s25
  $region7: #{net_forward.1} parent=0 // loop_footer_branch
    %24 = sbr.rel target = $region3
  $region8: #{net_forward.1} parent=0 // loop_exit
    _

</llo_original>
